<compile_context>
chip_gen: v7x
topology: tpu7x:2x2x1
jax: 0.10.0
libtpu: 0.0.40
codegen_flags: <defaults>
</compile_context>

<pallas_src>
import math

import jax
import jax.numpy as jnp
from jax.experimental import pallas as pl
from jax.experimental.pallas import tpu as pltpu

LANE = 128
SUBLANE = 8
NEG_INF = -1e30


def _round_up(n, m):
    return ((n + m - 1) // m) * m


def _pad_axis(x, target, axis):
    pad = target - x.shape[axis]
    if pad <= 0:
        return x
    widths = [(0, 0)] * x.ndim
    widths[axis] = (0, pad)
    return jnp.pad(x, widths)


def _vmem_capacity_bytes():
    """Physical per-core VMEM; conservative 64 MiB (v7x) fallback if unknown."""
    try:
        info = pltpu.get_tpu_info()
        cap = int(getattr(info, "vmem_capacity_bytes", 0))
        if cap > 0:
            return cap
    except Exception:
        pass
    return 64 << 20


# ----------------------------------------------------------------------------
# Tiled matmul kernels: grid=(M/TM, K/TK), K-accumulation in f32 scratch.
# ----------------------------------------------------------------------------
def _mm_kernel_plain(a_ref, b_ref, o_ref, acc_ref):
    k = pl.program_id(1)

    @pl.when(k == 0)
    def _():
        acc_ref[...] = jnp.zeros_like(acc_ref)

    acc_ref[...] += jnp.dot(a_ref[...], b_ref[...],
                            preferred_element_type=jnp.float32)

    @pl.when(k == pl.num_programs(1) - 1)
    def _():
        o_ref[...] = acc_ref[...].astype(o_ref.dtype)


def _mm_kernel_bias_relu(a_ref, b_ref, bias_ref, o_ref, acc_ref):
    k = pl.program_id(1)

    @pl.when(k == 0)
    def _():
        acc_ref[...] = jnp.zeros_like(acc_ref)

    acc_ref[...] += jnp.dot(a_ref[...], b_ref[...],
                            preferred_element_type=jnp.float32)

    @pl.when(k == pl.num_programs(1) - 1)
    def _():
        # Fused bias + ReLU + bf16 down-cast: one VPU pass; h carried in bf16.
        o_ref[...] = jnp.maximum(acc_ref[...] + bias_ref[...], 0.0).astype(o_ref.dtype)


def _tiled_matmul(a, b, bias=None, *, out_dtype=jnp.bfloat16,
                  tile_m, tile_k, vmem_cap):
    """out = a @ b  (+ bias, ReLU when bias is given), row-tiled + K-accumulated."""
    M, K = a.shape
    K2, Nb = b.shape
    assert K == K2
    # All dims are multiples of LANE, so gcd keeps tiles 128-aligned and exact.
    tm = math.gcd(M, tile_m)
    tk = math.gcd(K, tile_k)
    grid = (M // tm, K // tk)

    in_specs = [pl.BlockSpec((tm, tk), lambda i, k: (i, k)),
                pl.BlockSpec((tk, Nb), lambda i, k: (k, 0))]
    args = [a, b]
    if bias is None:
        kernel = _mm_kernel_plain
    else:
        kernel = _mm_kernel_bias_relu
        in_specs.append(pl.BlockSpec((1, Nb), lambda i, k: (0, 0)))
        args.append(bias)

    out_bytes = jnp.dtype(out_dtype).itemsize
    need = (2 * (tm * tk * a.dtype.itemsize + tk * Nb * b.dtype.itemsize)  # dbl-buffered inputs
            + 2 * tm * Nb * out_bytes                                      # dbl-buffered output
            + tm * Nb * 4                                                  # f32 accumulator
            + (Nb * 4 if bias is not None else 0))
    vmem_limit = int(min(max(need + (2 << 20), 4 << 20), int(0.85 * vmem_cap)))

    return pl.pallas_call(
        kernel,
        out_shape=jax.ShapeDtypeStruct((M, Nb), out_dtype),
        grid_spec=pltpu.PrefetchScalarGridSpec(
            num_scalar_prefetch=0, grid=grid,
            in_specs=in_specs,
            out_specs=pl.BlockSpec((tm, Nb), lambda i, k: (i, 0)),
            scratch_shapes=[pltpu.VMEM((tm, Nb), jnp.float32)]),
        compiler_params=pltpu.CompilerParams(
            dimension_semantics=("parallel", "arbitrary"),
            vmem_limit_bytes=vmem_limit),
    )(*args)


# ----------------------------------------------------------------------------
# Pool + Linear + log_softmax head (tiled over nodes, exact f32 mean).
# ----------------------------------------------------------------------------
def _head_kernel(p_ref, h_ref, inv_ref, wl_ref, bl_ref, out_ref, acc_ref):
    k = pl.program_id(0)

    @pl.when(k == 0)
    def _():
        acc_ref[...] = jnp.zeros_like(acc_ref)

    # Exact 0/1 bf16 indicator sum-pool on the MXU.
    acc_ref[...] += jnp.dot(p_ref[...], h_ref[...],
                            preferred_element_type=jnp.float32)

    @pl.when(k == pl.num_programs(0) - 1)
    def _():
        pooled = acc_ref[...] * inv_ref[...]                     # f32 mean (exact)
        logits = jnp.dot(pooled.astype(jnp.bfloat16), wl_ref[...],
                         preferred_element_type=jnp.float32) + bl_ref[...]
        m = jnp.max(logits, axis=-1, keepdims=True)
        lse = jnp.log(jnp.sum(jnp.exp(logits - m), axis=-1, keepdims=True)) + m
        out_ref[...] = logits - lse


def _pool_head(pool_ind, h, inv_bcast, wl, bl, *, tile_k, vmem_cap):
    Gp, Np = pool_ind.shape
    _, Hp = h.shape
    _, Cp = wl.shape
    tk = math.gcd(Np, tile_k)
    grid = (Np // tk,)
    need = (2 * (Gp * tk * 2 + tk * Hp * 2) + 2 * Gp * Hp * 4
            + Hp * Cp * 2 + Cp * 4 + Gp * Cp * 4)
    vmem_limit = int(min(max(need + (2 << 20), 4 << 20), int(0.85 * vmem_cap)))
    return pl.pallas_call(
        _head_kernel,
        out_shape=jax.ShapeDtypeStruct((Gp, Cp), jnp.float32),
        grid_spec=pltpu.PrefetchScalarGridSpec(
            num_scalar_prefetch=0, grid=grid,
            in_specs=[pl.BlockSpec((Gp, tk), lambda k: (0, k)),
                      pl.BlockSpec((tk, Hp), lambda k: (k, 0)),
                      pl.BlockSpec((Gp, Hp), lambda k: (0, 0)),
                      pl.BlockSpec((Hp, Cp), lambda k: (0, 0)),
                      pl.BlockSpec((1, Cp), lambda k: (0, 0))],
            out_specs=pl.BlockSpec((Gp, Cp), lambda k: (0, 0)),
            scratch_shapes=[pltpu.VMEM((Gp, Hp), jnp.float32)]),
        compiler_params=pltpu.CompilerParams(
            dimension_semantics=("arbitrary",),
            vmem_limit_bytes=vmem_limit),
    )(pool_ind, h, inv_bcast, wl, bl)


# ----------------------------------------------------------------------------
# Fused single-invocation kernel (small-problem fast path: all VMEM-resident).
# ----------------------------------------------------------------------------
def _make_fused_kernel(num_extra, transform_first):
    def kernel(a_ref, x_ref, w1_ref, convw_ref, bias_ref, p_ref, inv_ref,
               wl_ref, bl_ref, out_ref):
        a = a_ref[...]
        # conv1 (+ folded BN); order from padded widths so the Np x Np
        # propagation contracts over min(Fp, Hp).
        if transform_first:
            t = jnp.dot(x_ref[...], w1_ref[...], preferred_element_type=jnp.float32)
            h = jnp.dot(a, t.astype(jnp.bfloat16), preferred_element_type=jnp.float32)
        else:
            t = jnp.dot(a, x_ref[...], preferred_element_type=jnp.float32)
            h = jnp.dot(t.astype(jnp.bfloat16), w1_ref[...],
                        preferred_element_type=jnp.float32)
        # Fused bias + ReLU + bf16 down-cast; h carried in bf16 between layers.
        h = jnp.maximum(h + bias_ref[0:1, :], 0.0).astype(jnp.bfloat16)

        for i in range(num_extra):                       # statically unrolled
            hw = jnp.dot(h, convw_ref[i], preferred_element_type=jnp.float32)
            hi = jnp.dot(a, hw.astype(jnp.bfloat16),
                         preferred_element_type=jnp.float32) + bias_ref[i + 1:i + 2, :]
            h = jnp.maximum(hi, 0.0).astype(jnp.bfloat16)

        # Exact mean pool: 0/1 bf16 sum-pool (MXU) * f32 1/count (VPU).
        pooled = jnp.dot(p_ref[...], h, preferred_element_type=jnp.float32) * inv_ref[...]

        logits = jnp.dot(pooled.astype(jnp.bfloat16), wl_ref[...],
                         preferred_element_type=jnp.float32) + bl_ref[...]
        m = jnp.max(logits, axis=-1, keepdims=True)
        lse = jnp.log(jnp.sum(jnp.exp(logits - m), axis=-1, keepdims=True)) + m
        out_ref[...] = logits - lse
    return kernel


# ----------------------------------------------------------------------------
# Wrapper: BN folding, MXU-friendly padding, bf16 casting, path selection.
# ----------------------------------------------------------------------------
def gcn_forward(a_hat, x, w1, b1, bn_scale, bn_shift, conv_w, conv_b,
                pool_ind, inv_counts, wl, bl, path="auto"):
    N, F_in = x.shape
    H = w1.shape[1]
    L_extra = conv_w.shape[0]
    G = pool_ind.shape[0]
    C = wl.shape[1]

    cap = _vmem_capacity_bytes()
    # 256-aligned tile targets (native on v6e/v7x 256x256 MXUs, fine on v5e);
    # larger tiles when physical VMEM allows (128 MiB v5e/v6e vs 64 MiB v7x).
    tile = 512 if cap <= (64 << 20) else 1024

    # Fold BatchNorm eval affine into conv1 (exact): W1' = W1*s, b1' = b1*s + t.
    w1_eff = w1 * bn_scale
    b1_eff = b1 * bn_scale + bn_shift

    Np = _round_up(N, LANE)
    Fp = _round_up(F_in, LANE)
    Hp = _round_up(H, LANE)
    Cp = _round_up(C, LANE)
    Gp = _round_up(G, SUBLANE)

    bf = jnp.bfloat16
    a_p = _pad_axis(_pad_axis(a_hat, Np, 0), Np, 1).astype(bf)
    x_p = _pad_axis(_pad_axis(x, Np, 0), Fp, 1).astype(bf)
    w1_p = _pad_axis(_pad_axis(w1_eff, Fp, 0), Hp, 1).astype(bf)
    b1_p = _pad_axis(b1_eff, Hp, 1).astype(jnp.float32)
    convw_p = _pad_axis(_pad_axis(conv_w, Hp, 1), Hp, 2).astype(bf)
    convb_p = _pad_axis(conv_b, Hp, 2).astype(jnp.float32)           # [L-1, 1, Hp]
    wl_p = _pad_axis(_pad_axis(wl, Hp, 0), Cp, 1).astype(bf)

    # Exact 0/1 sum-pool indicator (bf16) + f32 per-graph 1/count.
    p_ind = _pad_axis(_pad_axis(pool_ind, Gp, 0), Np, 1).astype(bf)
    inv_p = _pad_axis(inv_counts, Gp, 0).astype(jnp.float32)          # [Gp, 1]
    inv_b = jnp.broadcast_to(inv_p, (Gp, Hp)).astype(jnp.float32)

    # Lane-dense class dim; padded logits pinned to -1e30 -> log_softmax exact.
    bl_p = jnp.full((1, Cp), NEG_INF, jnp.float32).at[:, :C].set(bl)

    transform_first = Fp >= Hp    # propagation contracts over min(Fp, Hp)

    # Footprint incl. f32 intermediates (ax/h/hw) for the fused path.
    op_bytes = (a_p.size * 2 + x_p.size * 2 + w1_p.size * 2 + convw_p.size * 2
                + (1 + L_extra) * Hp * 4 + p_ind.size * 2 + inv_b.size * 4
                + wl_p.size * 2 + Cp * 4 + Gp * Cp * 4)
    inter_bytes = 3 * Np * max(Fp, Hp) * 4 + Np * Hp * 2
    if path == "auto":
        path = "fused" if (op_bytes + inter_bytes) <= int(0.5 * cap) else "tiled"

    if path == "fused":
        bias_rows = [b1_p] + [convb_p[i] for i in range(L_extra)]
        bias_pack = jnp.concatenate(bias_rows, axis=0)                # [1+L_extra, Hp]
        convw_arg = convw_p if L_extra > 0 else jnp.zeros((1, Hp, Hp), bf)
        args = (a_p, x_p, w1_p, convw_arg, bias_pack, p_ind, inv_b, wl_p, bl_p)
        vmem_limit = int(min(max(op_bytes + inter_bytes + (4 << 20), 8 << 20),
                             int(0.85 * cap)))
        out_padded = pl.pallas_call(
            _make_fused_kernel(L_extra, transform_first),
            out_shape=jax.ShapeDtypeStruct((Gp, Cp), jnp.float32),
            in_specs=[pl.BlockSpec(memory_space=pltpu.MemorySpace.VMEM)] * len(args),
            out_specs=pl.BlockSpec(memory_space=pltpu.MemorySpace.VMEM),
            compiler_params=pltpu.CompilerParams(vmem_limit_bytes=vmem_limit),
        )(*args)
        return out_padded[:G, :C]

    # ---- tiled / gridded path (scales with N; parallel row tiles) ----
    def mm(a, b, bias=None):
        return _tiled_matmul(a, b, bias, out_dtype=bf,
                             tile_m=tile, tile_k=tile, vmem_cap=cap)

    if transform_first:
        t = mm(x_p, w1_p)                       # [Np, Hp]  X @ W1'
        h = mm(a_p, t, bias=b1_p)               # relu(A_hat @ (X W1') + b1')
    else:
        t = mm(a_p, x_p)                        # [Np, Fp]  A_hat @ X
        h = mm(t, w1_p, bias=b1_p)              # relu((A_hat X) W1' + b1')

    for i in range(L_extra):
        t = mm(h, convw_p[i])                   # [Np, Hp]  h @ Wi
        h = mm(a_p, t, bias=convb_p[i])         # relu(A_hat @ (h Wi) + bi)

    out_padded = _pool_head(p_ind, h, inv_b, wl_p, bl_p, tile_k=tile, vmem_cap=cap)
    return out_padded[:G, :C]


# ----------------------------------------------------------------------------
# Glue: graph construction, normalized adjacency, pooling, reference.
# ----------------------------------------------------------------------------
def build_norm_adj(edge_index, num_nodes):
    """A_hat = D^{-1/2} (A + I) D^{-1/2} from a [2, E] edge list."""
    A = jnp.zeros((num_nodes, num_nodes), jnp.float32)
    A = A.at[edge_index[0], edge_index[1]].set(1.0)
    idx = jnp.arange(num_nodes)
    A = A.at[idx, idx].set(1.0)   # self-loops
    deg = jnp.sum(A, axis=1)
    dinv = jax.lax.rsqrt(deg)
    return A * dinv[:, None] * dinv[None, :]


def build_pool_indicator(batch, num_graphs):
    """0/1 indicator [G, N] and f32 per-graph 1/|graph| column [G, 1]."""
    one_hot = (batch[None, :] == jnp.arange(num_graphs)[:, None]).astype(jnp.float32)
    counts = jnp.sum(one_hot, axis=1, keepdims=True)
    inv = jnp.where(counts > 0, 1.0 / jnp.maximum(counts, 1.0), 0.0)
    return one_hot, inv


def gcn_reference(a_hat, x, w1, b1, bn_scale, bn_shift, conv_w, conv_b,
                  pool_ind, inv_counts, wl, bl):
    """Pure-JAX f32 reference for correctness checking."""
    h = a_hat @ (x @ w1) + b1
    h = jnp.maximum(h * bn_scale + bn_shift, 0.0)
    for i in range(conv_w.shape[0]):
        h = jnp.maximum(a_hat @ (h @ conv_w[i]) + conv_b[i], 0.0)
    g = (pool_ind @ h) * inv_counts
    logits = g @ wl + bl
    return jax.nn.log_softmax(logits, axis=-1)


if __name__ == "__main__":
    # Small, forward-consistent sizes.
    N = 16            # nodes
    F_IN = 16         # dataset.num_node_features
    HID = 32          # hidden
    C = 8             # dataset.num_classes
    NUM_LAYERS = 3    # -> 2 extra GCN layers after conv1
    G = 2             # graphs in the batch

    key = jax.random.PRNGKey(0)
    ks = jax.random.split(key, 10)

    x = jax.random.normal(ks[0], (N, F_IN), jnp.float32)

    # batch vector: nodes 0..7 -> graph 0, nodes 8..15 -> graph 1.
    batch = jnp.concatenate([jnp.zeros(N // 2, jnp.int32), jnp.ones(N // 2, jnp.int32)])

    # Edge list: a ring inside each graph, made symmetric.
    src0 = jnp.arange(N // 2)
    dst0 = (src0 + 1) % (N // 2)
    src1 = src0 + N // 2
    dst1 = dst0 + N // 2
    src = jnp.concatenate([src0, dst0, src1, dst1])
    dst = jnp.concatenate([dst0, src0, dst1, src1])
    edge_index = jnp.stack([src, dst]).astype(jnp.int32)

    a_hat = build_norm_adj(edge_index, N)
    pool_ind, inv_counts = build_pool_indicator(batch, G)

    def init_w(k, fan_in, shape):
        return jax.random.normal(k, shape, jnp.float32) / jnp.sqrt(jnp.float32(fan_in))

    w1 = init_w(ks[1], F_IN, (F_IN, HID))
    b1 = jnp.zeros((1, HID), jnp.float32)

    # BatchNorm eval: running_mean=0, running_var=1, learnable gamma/beta.
    gamma = 1.0 + 0.1 * jax.random.normal(ks[2], (HID,), jnp.float32)
    beta = 0.1 * jax.random.normal(ks[3], (HID,), jnp.float32)
    run_mean = jnp.zeros((HID,), jnp.float32)
    run_var = jnp.ones((HID,), jnp.float32)
    eps = 1e-5
    bn_scale = (gamma * jax.lax.rsqrt(run_var + eps)).reshape(1, HID)
    bn_shift = (beta - run_mean * gamma * jax.lax.rsqrt(run_var + eps)).reshape(1, HID)

    conv_w = jnp.stack([init_w(ks[4], HID, (HID, HID)),
                        init_w(ks[5], HID, (HID, HID))])               # [L-1, H, H]
    conv_b = jnp.zeros((NUM_LAYERS - 1, 1, HID), jnp.float32)           # [L-1, 1, H]

    # PyTorch Linear stores [out, in]; pass its transpose so kernel does g @ W.
    wl_torch = init_w(ks[6], HID, (C, HID))
    wl = wl_torch.T                                                      # [H, C]
    bl = (0.1 * jax.random.normal(ks[7], (C,), jnp.float32)).reshape(1, C)

    ref = gcn_reference(a_hat, x, w1, b1, bn_scale, bn_shift, conv_w, conv_b,
                        pool_ind, inv_counts, wl, bl)

    # Path 1: auto (fully VMEM-resident fused kernel at these toy shapes).
    out_fused = gcn_forward(a_hat, x, w1, b1, bn_scale, bn_shift, conv_w, conv_b,
                            pool_ind, inv_counts, wl, bl, path="auto")
    out_fused = jax.block_until_ready(out_fused)
    assert out_fused.shape == (G, C)
    assert jnp.allclose(jnp.sum(jnp.exp(out_fused), axis=-1), 1.0, atol=1e-4)
    assert jnp.allclose(out_fused, ref, atol=0.15), (out_fused, ref)

    # Path 2: force the tiled / gridded pipeline (what large graphs use).
    out_tiled = gcn_forward(a_hat, x, w1, b1, bn_scale, bn_shift, conv_w, conv_b,
                            pool_ind, inv_counts, wl, bl, path="tiled")
    out_tiled = jax.block_until_ready(out_tiled)
    assert out_tiled.shape == (G, C)
    assert jnp.allclose(jnp.sum(jnp.exp(out_tiled), axis=-1), 1.0, atol=1e-4)
    assert jnp.allclose(out_tiled, ref, atol=0.15), (out_tiled, ref)

    print("KERNEL_OK")
</pallas_src>

<mosaic_0001>
module attributes {stable_mosaic.version = 11 : i64} {
  func.func @kernel(%arg0: memref<128x128xbf16, #tpu.memory_space<vmem>>, %arg1: memref<128x128xbf16, #tpu.memory_space<vmem>>, %arg2: memref<128x128xbf16, #tpu.memory_space<vmem>>, %arg3: memref<2x128x128xbf16, #tpu.memory_space<vmem>>, %arg4: memref<3x128xf32, #tpu.memory_space<vmem>>, %arg5: memref<8x128xbf16, #tpu.memory_space<vmem>>, %arg6: memref<8x128xf32, #tpu.memory_space<vmem>>, %arg7: memref<128x128xbf16, #tpu.memory_space<vmem>>, %arg8: memref<1x128xf32, #tpu.memory_space<vmem>>, %arg9: memref<8x128xf32, #tpu.memory_space<vmem>>) attributes {dimension_semantics = [], scalar_prefetch = 0 : i64, scratch_operands = 0 : i64, tpu.core_type = #tpu.core_type<tc>} {
    %c0 = arith.constant 0 : index
    %c0_0 = arith.constant 0 : index
    %0 = vector.load %arg0[%c0, %c0_0] : memref<128x128xbf16, #tpu.memory_space<vmem>>, vector<128x128xbf16>
    %c0_1 = arith.constant 0 : index
    %c0_2 = arith.constant 0 : index
    %1 = vector.load %arg1[%c0_1, %c0_2] : memref<128x128xbf16, #tpu.memory_space<vmem>>, vector<128x128xbf16>
    %c0_3 = arith.constant 0 : index
    %c0_4 = arith.constant 0 : index
    %2 = vector.load %arg2[%c0_3, %c0_4] : memref<128x128xbf16, #tpu.memory_space<vmem>>, vector<128x128xbf16>
    %cst = arith.constant dense<0.000000e+00> : vector<128x128xf32>
    %3 = tpu.matmul %1, %2, %cst {dimension_numbers = #tpu.dot_dimension_numbers<[1], [0], [0], [1], [0, 0, 1, 1], [], []>} : vector<128x128xbf16>, vector<128x128xbf16>, vector<128x128xf32> -> vector<128x128xf32>
    %4 = arith.truncf %3 : vector<128x128xf32> to vector<128x128xbf16>
    %cst_5 = arith.constant dense<0.000000e+00> : vector<128x128xf32>
    %5 = tpu.matmul %0, %4, %cst_5 {dimension_numbers = #tpu.dot_dimension_numbers<[1], [0], [0], [1], [0, 0, 1, 1], [], []>} : vector<128x128xbf16>, vector<128x128xbf16>, vector<128x128xf32> -> vector<128x128xf32>
    %c0_6 = arith.constant 0 : index
    %c0_7 = arith.constant 0 : index
    %6 = vector.load %arg4[%c0_6, %c0_7] : memref<3x128xf32, #tpu.memory_space<vmem>>, vector<1x128xf32>
    %7 = vector.broadcast %6 : vector<1x128xf32> to vector<128x128xf32>
    %8 = arith.addf %5, %7 : vector<128x128xf32>
    %cst_8 = arith.constant 0.000000e+00 : f32
    %9 = vector.broadcast %cst_8 : f32 to vector<128x128xf32>
    %10 = arith.maximumf %8, %9 : vector<128x128xf32>
    %11 = arith.truncf %10 : vector<128x128xf32> to vector<128x128xbf16>
    %c0_9 = arith.constant 0 : index
    %c0_10 = arith.constant 0 : index
    %c0_11 = arith.constant 0 : index
    %12 = vector.load %arg3[%c0_9, %c0_10, %c0_11] : memref<2x128x128xbf16, #tpu.memory_space<vmem>>, vector<1x128x128xbf16>
    %13 = vector.shape_cast %12 : vector<1x128x128xbf16> to vector<128x128xbf16>
    %cst_12 = arith.constant dense<0.000000e+00> : vector<128x128xf32>
    %14 = tpu.matmul %11, %13, %cst_12 {dimension_numbers = #tpu.dot_dimension_numbers<[1], [0], [0], [1], [0, 0, 1, 1], [], []>} : vector<128x128xbf16>, vector<128x128xbf16>, vector<128x128xf32> -> vector<128x128xf32>
    %15 = arith.truncf %14 : vector<128x128xf32> to vector<128x128xbf16>
    %cst_13 = arith.constant dense<0.000000e+00> : vector<128x128xf32>
    %16 = tpu.matmul %0, %15, %cst_13 {dimension_numbers = #tpu.dot_dimension_numbers<[1], [0], [0], [1], [0, 0, 1, 1], [], []>} : vector<128x128xbf16>, vector<128x128xbf16>, vector<128x128xf32> -> vector<128x128xf32>
    %c1 = arith.constant 1 : index
    %c0_14 = arith.constant 0 : index
    %17 = vector.load %arg4[%c1, %c0_14] : memref<3x128xf32, #tpu.memory_space<vmem>>, vector<1x128xf32>
    %18 = vector.broadcast %17 : vector<1x128xf32> to vector<128x128xf32>
    %19 = arith.addf %16, %18 : vector<128x128xf32>
    %cst_15 = arith.constant 0.000000e+00 : f32
    %20 = vector.broadcast %cst_15 : f32 to vector<128x128xf32>
    %21 = arith.maximumf %19, %20 : vector<128x128xf32>
    %22 = arith.truncf %21 : vector<128x128xf32> to vector<128x128xbf16>
    %c1_16 = arith.constant 1 : index
    %c0_17 = arith.constant 0 : index
    %c0_18 = arith.constant 0 : index
    %23 = vector.load %arg3[%c1_16, %c0_17, %c0_18] : memref<2x128x128xbf16, #tpu.memory_space<vmem>>, vector<1x128x128xbf16>
    %24 = vector.shape_cast %23 : vector<1x128x128xbf16> to vector<128x128xbf16>
    %cst_19 = arith.constant dense<0.000000e+00> : vector<128x128xf32>
    %25 = tpu.matmul %22, %24, %cst_19 {dimension_numbers = #tpu.dot_dimension_numbers<[1], [0], [0], [1], [0, 0, 1, 1], [], []>} : vector<128x128xbf16>, vector<128x128xbf16>, vector<128x128xf32> -> vector<128x128xf32>
    %26 = arith.truncf %25 : vector<128x128xf32> to vector<128x128xbf16>
    %cst_20 = arith.constant dense<0.000000e+00> : vector<128x128xf32>
    %27 = tpu.matmul %0, %26, %cst_20 {dimension_numbers = #tpu.dot_dimension_numbers<[1], [0], [0], [1], [0, 0, 1, 1], [], []>} : vector<128x128xbf16>, vector<128x128xbf16>, vector<128x128xf32> -> vector<128x128xf32>
    %c2 = arith.constant 2 : index
    %c0_21 = arith.constant 0 : index
    %28 = vector.load %arg4[%c2, %c0_21] : memref<3x128xf32, #tpu.memory_space<vmem>>, vector<1x128xf32>
    %29 = vector.broadcast %28 : vector<1x128xf32> to vector<128x128xf32>
    %30 = arith.addf %27, %29 : vector<128x128xf32>
    %cst_22 = arith.constant 0.000000e+00 : f32
    %31 = vector.broadcast %cst_22 : f32 to vector<128x128xf32>
    %32 = arith.maximumf %30, %31 : vector<128x128xf32>
    %33 = arith.truncf %32 : vector<128x128xf32> to vector<128x128xbf16>
    %c0_23 = arith.constant 0 : index
    %c0_24 = arith.constant 0 : index
    %34 = vector.load %arg5[%c0_23, %c0_24] : memref<8x128xbf16, #tpu.memory_space<vmem>>, vector<8x128xbf16>
    %cst_25 = arith.constant dense<0.000000e+00> : vector<8x128xf32>
    %35 = tpu.matmul %34, %33, %cst_25 {dimension_numbers = #tpu.dot_dimension_numbers<[1], [0], [0], [1], [0, 0, 1, 1], [], []>} : vector<8x128xbf16>, vector<128x128xbf16>, vector<8x128xf32> -> vector<8x128xf32>
    %c0_26 = arith.constant 0 : index
    %c0_27 = arith.constant 0 : index
    %36 = vector.load %arg6[%c0_26, %c0_27] : memref<8x128xf32, #tpu.memory_space<vmem>>, vector<8x128xf32>
    %37 = arith.mulf %35, %36 : vector<8x128xf32>
    %38 = arith.truncf %37 : vector<8x128xf32> to vector<8x128xbf16>
    %c0_28 = arith.constant 0 : index
    %c0_29 = arith.constant 0 : index
    %39 = vector.load %arg7[%c0_28, %c0_29] : memref<128x128xbf16, #tpu.memory_space<vmem>>, vector<128x128xbf16>
    %cst_30 = arith.constant dense<0.000000e+00> : vector<8x128xf32>
    %40 = tpu.matmul %38, %39, %cst_30 {dimension_numbers = #tpu.dot_dimension_numbers<[1], [0], [0], [1], [0, 0, 1, 1], [], []>} : vector<8x128xbf16>, vector<128x128xbf16>, vector<8x128xf32> -> vector<8x128xf32>
    %c0_31 = arith.constant 0 : index
    %c0_32 = arith.constant 0 : index
    %41 = vector.load %arg8[%c0_31, %c0_32] : memref<1x128xf32, #tpu.memory_space<vmem>>, vector<1x128xf32>
    %42 = vector.broadcast %41 : vector<1x128xf32> to vector<8x128xf32>
    %43 = arith.addf %40, %42 : vector<8x128xf32>
    %cst_33 = arith.constant dense<0xFF800000> : vector<8xf32>
    %44 = vector.multi_reduction <maximumf>, %43, %cst_33 [1] : vector<8x128xf32> to vector<8xf32>
    %45 = vector.shape_cast %44 : vector<8xf32> to vector<8x1xf32>
    %46 = vector.broadcast %45 : vector<8x1xf32> to vector<8x128xf32>
    %47 = arith.subf %43, %46 : vector<8x128xf32>
    %48 = math.exp %47 : vector<8x128xf32>
    %cst_34 = arith.constant dense<0.000000e+00> : vector<8xf32>
    %49 = vector.multi_reduction <add>, %48, %cst_34 [1] : vector<8x128xf32> to vector<8xf32>
    %50 = vector.shape_cast %49 : vector<8xf32> to vector<8x1xf32>
    %51 = math.log %50 : vector<8x1xf32>
    %52 = arith.addf %51, %45 : vector<8x1xf32>
    %53 = vector.broadcast %52 : vector<8x1xf32> to vector<8x128xf32>
    %54 = arith.subf %43, %53 : vector<8x128xf32>
    %c0_35 = arith.constant 0 : index
    %c0_36 = arith.constant 0 : index
    %55 = vector.load %arg9[%c0_35, %c0_36] : memref<8x128xf32, #tpu.memory_space<vmem>>, vector<8x128xf32>
    tpu.vector_store %arg9[%c0_35, %c0_36], %54 {strides = array<i32>} : memref<8x128xf32, #tpu.memory_space<vmem>>, vector<8x128xf32>,
    return
  }
}

</mosaic_0001>

<llo_original>
// kernel: tpu_custom_call.1
$region0: #{tpu_custom_call.1}
  #allocation0 [shape = 'u32[]', space=smem, size = 0x4, offset = 0x4, fixed_abs, tag = 'smem constant byte address 0x4 - core index']
  #allocation1 [shape = 'u32[144,128]{1,0:T(1,128)}', space=vmem, size = 0x12000, scoped, tag = 'internal scratch']
  %s0 = inlined_call_operand.hbm [shape: bf16[128,128], index: 0, kind: input, shape index: {}]
  %s1 = inlined_call_operand.hbm [shape: bf16[128,128], index: 1, kind: input, shape index: {}]
  %s2 = inlined_call_operand.hbm [shape: bf16[128,128], index: 2, kind: input, shape index: {}]
  %s3 = inlined_call_operand.hbm [shape: bf16[2,128,128], index: 3, kind: input, shape index: {}]
  %s4 = inlined_call_operand.vmem [shape: f32[3,128], index: 4, kind: input, shape index: {}]
  %s5 = inlined_call_operand.vmem [shape: bf16[8,128], index: 5, kind: input, shape index: {}]
  %s6 = inlined_call_operand.vmem [shape: f32[8,128], index: 6, kind: input, shape index: {}]
  %s7 = inlined_call_operand.hbm [shape: bf16[128,128], index: 7, kind: input, shape index: {}]
  %s8 = inlined_call_operand.vmem [shape: f32[1,128], index: 8, kind: input, shape index: {}]
  %s9 = inlined_call_operand.hbm [shape: f32[8,128], index: 9, kind: output, shape index: {}]
  %s10 = sld [smem:[#allocation0]]
  $region66: #{tpu_custom_call.1} parent=0
    _
  %s12 = ssub.s32 1, %s10
  %s13 = scalar_select 0, %s12, %s10
  $region1: #{tpu_custom_call.1} parent=0
    #allocation2 [shape = 'u8[32768]{0}', space=vmem, size = 0x8000, scoped, tag = 'input window, operand 0, single buffered']
    #allocation3 [shape = 's32[1]{0}', space=sflag, size = 0x4, scoped, tag = 'scoped memory for tpu_custom_call.1']
    #allocation4 [shape = 's32[1]{0}', space=sflag, size = 0x4, scoped, tag = 'scoped memory for tpu_custom_call.1']
    #allocation5 [shape = 'u8[32768]{0}', space=vmem, size = 0x8000, scoped, tag = 'input window, operand 1, single buffered']
    #allocation6 [shape = 's32[1]{0}', space=sflag, size = 0x4, scoped, tag = 'scoped memory for tpu_custom_call.1']
    #allocation7 [shape = 'u8[32768]{0}', space=vmem, size = 0x8000, scoped, tag = 'input window, operand 2, single buffered']
    #allocation8 [shape = 'u8[65536]{0}', space=vmem, size = 0x10000, scoped, tag = 'input window, operand 3, single buffered']
    #allocation9 [shape = 's32[1]{0}', space=sflag, size = 0x4, scoped, tag = 'scoped memory for tpu_custom_call.1']
    #allocation10 [shape = 'u8[32768]{0}', space=vmem, size = 0x8000, scoped, tag = 'input window, operand 7, single buffered']
    #allocation11 [shape = 'u8[4096]{0}', space=vmem, size = 0x1000, scoped, tag = 'output window, operand 0, single buffered']
    %14 = vsyncpa [#allocation3], 0
    %15 = vsyncpa [#allocation6], 0
    %16 = vsyncpa [#allocation9], 0
    %17 = vsyncpa [#allocation4], 0
    // Predicated region
    $region2: #{tpu_custom_call.1} parent=1 // pred_check
      _
    $region3: #{tpu_custom_call.1} parent=1 // pred_check_branch
      %19 = sbr.rel (0) target = $region5
    $region4: #{tpu_custom_call.1} parent=1 // pred_region
      %s21 = ssub.s32 1024, 1024
      %22 = vsyncadd [#allocation3], %s21
      %s23 = sshll.u32 [#allocation2], 4
      %s24 = int_to_ptr.vmem [resolvable:$true] %s23
      %29 = dma.hbm_to_vmem [thread:$0]  %s0, 1024, %s24, [#allocation3], 64, 64, 4
    $region5: #{tpu_custom_call.1} parent=1 // pred_fallthru
      _
    // Predicated region
    $region6: #{tpu_custom_call.1} parent=1 // pred_check
      _
    $region7: #{tpu_custom_call.1} parent=1 // pred_check_branch
      %31 = sbr.rel (0) target = $region9
    $region8: #{tpu_custom_call.1} parent=1 // pred_region
      %s33 = ssub.s32 1024, 1024
      %34 = vsyncadd [#allocation6], %s33
      %s35 = sshll.u32 [#allocation5], 4
      %s36 = int_to_ptr.vmem [resolvable:$true] %s35
      %41 = dma.hbm_to_vmem [thread:$0]  %s1, 1024, %s36, [#allocation6], 64, 64, 4
    $region9: #{tpu_custom_call.1} parent=1 // pred_fallthru
      _
    // Predicated region
    $region10: #{tpu_custom_call.1} parent=1 // pred_check
      _
    $region11: #{tpu_custom_call.1} parent=1 // pred_check_branch
      %43 = sbr.rel (0) target = $region13
    $region12: #{tpu_custom_call.1} parent=1 // pred_region
      %s45 = ssub.s32 1024, 1024
      %46 = vsyncadd [#allocation6], %s45
      %s47 = sshll.u32 [#allocation7], 4
      %s48 = int_to_ptr.vmem [resolvable:$true] %s47
      %53 = dma.hbm_to_vmem [thread:$0]  %s2, 1024, %s48, [#allocation6], 64, 64, 4
    $region13: #{tpu_custom_call.1} parent=1 // pred_fallthru
      _
    // Predicated region
    $region14: #{tpu_custom_call.1} parent=1 // pred_check
      _
    $region15: #{tpu_custom_call.1} parent=1 // pred_check_branch
      %55 = sbr.rel (0) target = $region17
    $region16: #{tpu_custom_call.1} parent=1 // pred_region
      %s57 = ssub.s32 2048, 2048
      %58 = vsyncadd [#allocation9], %s57
      %s59 = sshll.u32 [#allocation8], 4
      %s60 = int_to_ptr.vmem [resolvable:$true] %s59
      %65 = dma.hbm_to_vmem [thread:$0]  %s3, 2048, %s60, [#allocation9], 64, 64, 4
    $region17: #{tpu_custom_call.1} parent=1 // pred_fallthru
      _
    // Predicated region
    $region18: #{tpu_custom_call.1} parent=1 // pred_check
      _
    $region19: #{tpu_custom_call.1} parent=1 // pred_check_branch
      %67 = sbr.rel (0) target = $region21
    $region20: #{tpu_custom_call.1} parent=1 // pred_region
      _
    $region21: #{tpu_custom_call.1} parent=1 // pred_fallthru
      _
    // Predicated region
    $region22: #{tpu_custom_call.1} parent=1 // pred_check
      _
    $region23: #{tpu_custom_call.1} parent=1 // pred_check_branch
      %69 = sbr.rel (0) target = $region25
    $region24: #{tpu_custom_call.1} parent=1 // pred_region
      _
    $region25: #{tpu_custom_call.1} parent=1 // pred_fallthru
      _
    // Predicated region
    $region26: #{tpu_custom_call.1} parent=1 // pred_check
      _
    $region27: #{tpu_custom_call.1} parent=1 // pred_check_branch
      %71 = sbr.rel (0) target = $region29
    $region28: #{tpu_custom_call.1} parent=1 // pred_region
      _
    $region29: #{tpu_custom_call.1} parent=1 // pred_fallthru
      _
    // Predicated region
    $region30: #{tpu_custom_call.1} parent=1 // pred_check
      _
    $region31: #{tpu_custom_call.1} parent=1 // pred_check_branch
      %73 = sbr.rel (0) target = $region33
    $region32: #{tpu_custom_call.1} parent=1 // pred_region
      %s75 = ssub.s32 1024, 1024
      %76 = vsyncadd [#allocation9], %s75
      %s77 = sshll.u32 [#allocation10], 4
      %s78 = int_to_ptr.vmem [resolvable:$true] %s77
      %83 = dma.hbm_to_vmem [thread:$0]  %s7, 1024, %s78, [#allocation9], 64, 64, 4
    $region33: #{tpu_custom_call.1} parent=1 // pred_fallthru
      _
    // Predicated region
    $region34: #{tpu_custom_call.1} parent=1 // pred_check
      _
    $region35: #{tpu_custom_call.1} parent=1 // pred_check_branch
      %85 = sbr.rel (0) target = $region37
    $region36: #{tpu_custom_call.1} parent=1 // pred_region
      _
    $region37: #{tpu_custom_call.1} parent=1 // pred_fallthru
      _
    // Predicated region
    $region38: #{tpu_custom_call.1} parent=1 // pred_check
      _
    $region39: #{tpu_custom_call.1} parent=1 // pred_check_branch
      %87 = sbr.rel (0) target = $region41
    $region40: #{tpu_custom_call.1} parent=1 // pred_region
      %88 = dma.done [#allocation3], 1024
    $region41: #{tpu_custom_call.1} parent=1 // pred_fallthru
      _
    // Predicated region
    $region42: #{tpu_custom_call.1} parent=1 // pred_check
      _
    $region43: #{tpu_custom_call.1} parent=1 // pred_check_branch
      %90 = sbr.rel (0) target = $region45
    $region44: #{tpu_custom_call.1} parent=1 // pred_region
      %91 = dma.done [#allocation6], 1024
    $region45: #{tpu_custom_call.1} parent=1 // pred_fallthru
      _
    // Predicated region
    $region46: #{tpu_custom_call.1} parent=1 // pred_check
      _
    $region47: #{tpu_custom_call.1} parent=1 // pred_check_branch
      %93 = sbr.rel (0) target = $region49
    $region48: #{tpu_custom_call.1} parent=1 // pred_region
      %94 = dma.done [#allocation6], 1024
    $region49: #{tpu_custom_call.1} parent=1 // pred_fallthru
      _
    // Predicated region
    $region50: #{tpu_custom_call.1} parent=1 // pred_check
      _
    $region51: #{tpu_custom_call.1} parent=1 // pred_check_branch
      %96 = sbr.rel (0) target = $region53
    $region52: #{tpu_custom_call.1} parent=1 // pred_region
      %97 = dma.done [#allocation9], 2048
    $region53: #{tpu_custom_call.1} parent=1 // pred_fallthru
      _
    // Predicated region
    $region54: #{tpu_custom_call.1} parent=1 // pred_check
      _
    $region55: #{tpu_custom_call.1} parent=1 // pred_check_branch
      %99 = sbr.rel (0) target = $region57
    $region56: #{tpu_custom_call.1} parent=1 // pred_region
      %100 = dma.done [#allocation9], 1024
    $region57: #{tpu_custom_call.1} parent=1 // pred_fallthru
      _
    %v102 = vld [vmem:[#allocation2] sm:$0xf]
    %v103 = vld [vmem:[#allocation2 + $0x4] sm:$0xf]
    %v104 = vld [vmem:[#allocation2 + $0x8] sm:$0xf]
    %v105 = vld [vmem:[#allocation2 + $0xc] sm:$0xf]
    %v106 = vld [vmem:[#allocation2 + $0x10] sm:$0xf]
    %v107 = vld [vmem:[#allocation2 + $0x14] sm:$0xf]
    %v108 = vld [vmem:[#allocation2 + $0x18] sm:$0xf]
    %v109 = vld [vmem:[#allocation2 + $0x1c] sm:$0xf]
    %v110 = vld [vmem:[#allocation2 + $0x20] sm:$0xf]
    %v111 = vld [vmem:[#allocation2 + $0x24] sm:$0xf]
    %v112 = vld [vmem:[#allocation2 + $0x28] sm:$0xf]
    %v113 = vld [vmem:[#allocation2 + $0x2c] sm:$0xf]
    %v114 = vld [vmem:[#allocation2 + $0x30] sm:$0xf]
    %v115 = vld [vmem:[#allocation2 + $0x34] sm:$0xf]
    %v116 = vld [vmem:[#allocation2 + $0x38] sm:$0xf]
    %v117 = vld [vmem:[#allocation2 + $0x3c] sm:$0xf]
    %v118 = vld [vmem:[#allocation5] sm:$0xf]
    %v119 = vld [vmem:[#allocation5 + $0x4] sm:$0xf]
    %v120 = vld [vmem:[#allocation5 + $0x8] sm:$0xf]
    %v121 = vld [vmem:[#allocation5 + $0xc] sm:$0xf]
    %v122 = vld [vmem:[#allocation5 + $0x10] sm:$0xf]
    %v123 = vld [vmem:[#allocation5 + $0x14] sm:$0xf]
    %v124 = vld [vmem:[#allocation5 + $0x18] sm:$0xf]
    %v125 = vld [vmem:[#allocation5 + $0x1c] sm:$0xf]
    %v126 = vld [vmem:[#allocation5 + $0x20] sm:$0xf]
    %v127 = vld [vmem:[#allocation5 + $0x24] sm:$0xf]
    %v128 = vld [vmem:[#allocation5 + $0x28] sm:$0xf]
    %v129 = vld [vmem:[#allocation5 + $0x2c] sm:$0xf]
    %v130 = vld [vmem:[#allocation5 + $0x30] sm:$0xf]
    %v131 = vld [vmem:[#allocation5 + $0x34] sm:$0xf]
    %v132 = vld [vmem:[#allocation5 + $0x38] sm:$0xf]
    %v133 = vld [vmem:[#allocation5 + $0x3c] sm:$0xf]
    %v134 = vld [vmem:[#allocation7] sm:$0xf]
    %v135 = vld [vmem:[#allocation7 + $0x4] sm:$0xf]
    %v136 = vld [vmem:[#allocation7 + $0x8] sm:$0xf]
    %v137 = vld [vmem:[#allocation7 + $0xc] sm:$0xf]
    %v138 = vld [vmem:[#allocation7 + $0x10] sm:$0xf]
    %v139 = vld [vmem:[#allocation7 + $0x14] sm:$0xf]
    %v140 = vld [vmem:[#allocation7 + $0x18] sm:$0xf]
    %v141 = vld [vmem:[#allocation7 + $0x1c] sm:$0xf]
    %v142 = vld [vmem:[#allocation7 + $0x20] sm:$0xf]
    %v143 = vld [vmem:[#allocation7 + $0x24] sm:$0xf]
    %v144 = vld [vmem:[#allocation7 + $0x28] sm:$0xf]
    %v145 = vld [vmem:[#allocation7 + $0x2c] sm:$0xf]
    %v146 = vld [vmem:[#allocation7 + $0x30] sm:$0xf]
    %v147 = vld [vmem:[#allocation7 + $0x34] sm:$0xf]
    %v148 = vld [vmem:[#allocation7 + $0x38] sm:$0xf]
    %v149 = vld [vmem:[#allocation7 + $0x3c] sm:$0xf]
    %v166 = vunpack.c.l.b16 %v118
    %v167 = vunpack.c.l.b16 %v119
    %v168 = vunpack.c.l.b16 %v120
    %v169 = vunpack.c.l.b16 %v121
    %v170 = vunpack.c.l.b16 %v122
    %v171 = vunpack.c.l.b16 %v123
    %v172 = vunpack.c.l.b16 %v124
    %v173 = vunpack.c.l.b16 %v125
    %v174 = vunpack.c.l.b16 %v126
    %v175 = vunpack.c.l.b16 %v127
    %v176 = vunpack.c.l.b16 %v128
    %v177 = vunpack.c.l.b16 %v129
    %v178 = vunpack.c.l.b16 %v130
    %v179 = vunpack.c.l.b16 %v131
    %v180 = vunpack.c.l.b16 %v132
    %v181 = vunpack.c.l.b16 %v133
    %v182 = vpack.c.b16 %v167, %v166
    %v183 = vpack.c.b16 %v169, %v168
    %v184 = vpack.c.b16 %v171, %v170
    %v185 = vpack.c.b16 %v173, %v172
    %v186 = vpack.c.b16 %v175, %v174
    %v187 = vpack.c.b16 %v177, %v176
    %v188 = vpack.c.b16 %v179, %v178
    %v189 = vpack.c.b16 %v181, %v180
    %v214 = vunpack.c.l.b16 %v134
    %v215 = vunpack.c.l.b16 %v135
    %v216 = vunpack.c.l.b16 %v136
    %v217 = vunpack.c.l.b16 %v137
    %v218 = vunpack.c.l.b16 %v138
    %v219 = vunpack.c.l.b16 %v139
    %v220 = vunpack.c.l.b16 %v140
    %v221 = vunpack.c.l.b16 %v141
    %v222 = vunpack.c.l.b16 %v142
    %v223 = vunpack.c.l.b16 %v143
    %v224 = vunpack.c.l.b16 %v144
    %v225 = vunpack.c.l.b16 %v145
    %v226 = vunpack.c.l.b16 %v146
    %v227 = vunpack.c.l.b16 %v147
    %v228 = vunpack.c.l.b16 %v148
    %v229 = vunpack.c.l.b16 %v149
    %v230 = vpack.c.b16 %v215, %v214
    %v231 = vpack.c.b16 %v217, %v216
    %v232 = vpack.c.b16 %v219, %v218
    %v233 = vpack.c.b16 %v221, %v220
    %v234 = vpack.c.b16 %v223, %v222
    %v235 = vpack.c.b16 %v225, %v224
    %v236 = vpack.c.b16 %v227, %v226
    %v237 = vpack.c.b16 %v229, %v228
    %246 = vmatprep.subr.bf16.mxu0 0
    %247 = vmatpush1.bf16.msra.mxu0 %v230
    %248 = vmatprep.subr.bf16.mxu0 0
    %249 = vmatpush1.bf16.msra.mxu0 %v231
    %250 = vmatprep.subr.bf16.mxu0 0
    %251 = vmatpush1.bf16.msra.mxu0 %v232
    %252 = vmatprep.subr.bf16.mxu0 0
    %253 = vmatpush1.bf16.msra.mxu0 %v233
    %254 = vmatprep.subr.bf16.mxu0 0
    %255 = vmatpush1.bf16.msra.mxu0 %v234
    %256 = vmatprep.subr.bf16.mxu0 0
    %257 = vmatpush1.bf16.msra.mxu0 %v235
    %258 = vmatprep.subr.bf16.mxu0 0
    %259 = vmatpush1.bf16.msra.mxu0 %v236
    %260 = vmatprep.subr.bf16.mxu0 0
    %261 = vmatpush1.bf16.msra.mxu0 %v237
    %262 = vmatprep.subr.bf16.mxu0 0
    %263 = vmatpush1.bf16.msra.mxu0 0
    %264 = vmatprep.subr.bf16.mxu0 0
    %265 = vmatpush1.bf16.msra.mxu0 0
    %266 = vmatprep.subr.bf16.mxu0 0
    %267 = vmatpush1.bf16.msra.mxu0 0
    %268 = vmatprep.subr.bf16.mxu0 0
    %269 = vmatpush1.bf16.msra.mxu0 0
    %270 = vmatprep.subr.bf16.mxu0 0
    %271 = vmatpush1.bf16.msra.mxu0 0
    %272 = vmatprep.subr.bf16.mxu0 0
    %273 = vmatpush1.bf16.msra.mxu0 0
    %274 = vmatprep.subr.bf16.mxu0 0
    %275 = vmatpush1.bf16.msra.mxu0 0
    %276 = vmatprep.subr.bf16.mxu0 0
    %277 = vmatpush1.bf16.msra.mxu0 0
    %278 = vmatprep.mubr.bf16.mxu0 0
    %279 = vmatmul.mubr.bf16.gmra.mrb[0].mxu0 %v182
    %v280 = vpop.f32.mrb[0].mxu0
    %v281 = vadd.f32 0.0, %v280
    %v282 = vpop.f32.mrb[0].mxu0
    %v283 = vpop.f32.mrb[0].mxu0
    %v284 = vadd.f32 0.0, %v283
    %v285 = vpop.f32.mrb[0].mxu0
    %286 = vmatprep.mubr.bf16.mxu0 0
    %287 = vmatmul.mubr.bf16.gmra.mrb[0].mxu0 %v183
    %v288 = vpop.f32.mrb[0].mxu0
    %v289 = vadd.f32 0.0, %v288
    %v290 = vpop.f32.mrb[0].mxu0
    %v291 = vpop.f32.mrb[0].mxu0
    %v292 = vadd.f32 0.0, %v291
    %v293 = vpop.f32.mrb[0].mxu0
    %294 = vmatprep.mubr.bf16.mxu0 0
    %295 = vmatmul.mubr.bf16.gmra.mrb[0].mxu0 %v184
    %v296 = vpop.f32.mrb[0].mxu0
    %v297 = vadd.f32 0.0, %v296
    %v298 = vpop.f32.mrb[0].mxu0
    %v299 = vpop.f32.mrb[0].mxu0
    %v300 = vadd.f32 0.0, %v299
    %v301 = vpop.f32.mrb[0].mxu0
    %302 = vmatprep.mubr.bf16.mxu0 0
    %303 = vmatmul.mubr.bf16.gmra.mrb[0].mxu0 %v185
    %v304 = vpop.f32.mrb[0].mxu0
    %v305 = vadd.f32 0.0, %v304
    %v306 = vpop.f32.mrb[0].mxu0
    %v307 = vpop.f32.mrb[0].mxu0
    %v308 = vadd.f32 0.0, %v307
    %v309 = vpop.f32.mrb[0].mxu0
    %310 = vmatprep.mubr.bf16.mxu0 0
    %311 = vmatmul.mubr.bf16.gmra.mrb[0].mxu0 %v186
    %v312 = vpop.f32.mrb[0].mxu0
    %v313 = vadd.f32 0.0, %v312
    %v314 = vpop.f32.mrb[0].mxu0
    %v315 = vpop.f32.mrb[0].mxu0
    %v316 = vadd.f32 0.0, %v315
    %v317 = vpop.f32.mrb[0].mxu0
    %318 = vmatprep.mubr.bf16.mxu0 0
    %319 = vmatmul.mubr.bf16.gmra.mrb[0].mxu0 %v187
    %v320 = vpop.f32.mrb[0].mxu0
    %v321 = vadd.f32 0.0, %v320
    %v322 = vpop.f32.mrb[0].mxu0
    %v323 = vpop.f32.mrb[0].mxu0
    %v324 = vadd.f32 0.0, %v323
    %v325 = vpop.f32.mrb[0].mxu0
    %326 = vmatprep.mubr.bf16.mxu0 0
    %327 = vmatmul.mubr.bf16.gmra.mrb[0].mxu0 %v188
    %v328 = vpop.f32.mrb[0].mxu0
    %v329 = vadd.f32 0.0, %v328
    %v330 = vpop.f32.mrb[0].mxu0
    %v331 = vpop.f32.mrb[0].mxu0
    %v332 = vadd.f32 0.0, %v331
    %v333 = vpop.f32.mrb[0].mxu0
    %334 = vmatprep.mubr.bf16.mxu0 0
    %335 = vmatmul.mubr.bf16.gmra.mrb[0].mxu0 %v189
    %v336 = vpop.f32.mrb[0].mxu0
    %v337 = vadd.f32 0.0, %v336
    %v338 = vpop.f32.mrb[0].mxu0
    %v339 = vpop.f32.mrb[0].mxu0
    %v340 = vadd.f32 0.0, %v339
    %v341 = vpop.f32.mrb[0].mxu0
    %342 = vdwg.mxu0
    %v343 = vpack.c.bf16 %v284, %v281
    %v344 = vpack.c.bf16 %v292, %v289
    %v345 = vpack.c.bf16 %v300, %v297
    %v346 = vpack.c.bf16 %v308, %v305
    %v347 = vpack.c.bf16 %v316, %v313
    %v348 = vpack.c.bf16 %v324, %v321
    %v349 = vpack.c.bf16 %v332, %v329
    %v350 = vpack.c.bf16 %v340, %v337
    %v351 = vld [vmem:[%s4] sm:$0x1]
    %v352 = vlaneseq
    %v353 = vshrl.u32 %v352, 7
    %v354 = vsub.s32 0, %v353
    %v355 = vrot.slane %v351, %v354
    %v372 = vunpack.c.l.b16 %v102
    %v373 = vunpack.c.l.b16 %v103
    %v374 = vunpack.c.l.b16 %v104
    %v375 = vunpack.c.l.b16 %v105
    %v376 = vunpack.c.l.b16 %v106
    %v377 = vunpack.c.l.b16 %v107
    %v378 = vunpack.c.l.b16 %v108
    %v379 = vunpack.c.l.b16 %v109
    %v380 = vunpack.c.l.b16 %v110
    %v381 = vunpack.c.l.b16 %v111
    %v382 = vunpack.c.l.b16 %v112
    %v383 = vunpack.c.l.b16 %v113
    %v384 = vunpack.c.l.b16 %v114
    %v385 = vunpack.c.l.b16 %v115
    %v386 = vunpack.c.l.b16 %v116
    %v387 = vunpack.c.l.b16 %v117
    %v388 = vpack.c.b16 %v373, %v372
    %v389 = vpack.c.b16 %v375, %v374
    %v390 = vpack.c.b16 %v377, %v376
    %v391 = vpack.c.b16 %v379, %v378
    %v392 = vpack.c.b16 %v381, %v380
    %v393 = vpack.c.b16 %v383, %v382
    %v394 = vpack.c.b16 %v385, %v384
    %v395 = vpack.c.b16 %v387, %v386
    %404 = vmatprep.subr.bf16.mxu0 0
    %405 = vmatpush1.bf16.msra.mxu0 %v343
    %406 = vmatprep.subr.bf16.mxu0 0
    %407 = vmatpush1.bf16.msra.mxu0 %v344
    %408 = vmatprep.subr.bf16.mxu0 0
    %409 = vmatpush1.bf16.msra.mxu0 %v345
    %410 = vmatprep.subr.bf16.mxu0 0
    %411 = vmatpush1.bf16.msra.mxu0 %v346
    %412 = vmatprep.subr.bf16.mxu0 0
    %413 = vmatpush1.bf16.msra.mxu0 %v347
    %414 = vmatprep.subr.bf16.mxu0 0
    %415 = vmatpush1.bf16.msra.mxu0 %v348
    %416 = vmatprep.subr.bf16.mxu0 0
    %417 = vmatpush1.bf16.msra.mxu0 %v349
    %418 = vmatprep.subr.bf16.mxu0 0
    %419 = vmatpush1.bf16.msra.mxu0 %v350
    %420 = vmatprep.subr.bf16.mxu0 0
    %421 = vmatpush1.bf16.msra.mxu0 0
    %422 = vmatprep.subr.bf16.mxu0 0
    %423 = vmatpush1.bf16.msra.mxu0 0
    %424 = vmatprep.subr.bf16.mxu0 0
    %425 = vmatpush1.bf16.msra.mxu0 0
    %426 = vmatprep.subr.bf16.mxu0 0
    %427 = vmatpush1.bf16.msra.mxu0 0
    %428 = vmatprep.subr.bf16.mxu0 0
    %429 = vmatpush1.bf16.msra.mxu0 0
    %430 = vmatprep.subr.bf16.mxu0 0
    %431 = vmatpush1.bf16.msra.mxu0 0
    %432 = vmatprep.subr.bf16.mxu0 0
    %433 = vmatpush1.bf16.msra.mxu0 0
    %434 = vmatprep.subr.bf16.mxu0 0
    %435 = vmatpush1.bf16.msra.mxu0 0
    %436 = vmatprep.mubr.bf16.mxu0 0
    %437 = vmatmul.mubr.bf16.gmra.mrb[0].mxu0 %v388
    %v438 = vpop.f32.mrb[0].mxu0
    %v439 = vadd.f32 %v355, %v438
    %v440 = vpop.f32.mrb[0].mxu0
    %v441 = vpop.f32.mrb[0].mxu0
    %v442 = vadd.f32 %v355, %v441
    %v443 = vpop.f32.mrb[0].mxu0
    %444 = vmatprep.mubr.bf16.mxu0 0
    %445 = vmatmul.mubr.bf16.gmra.mrb[0].mxu0 %v389
    %v446 = vpop.f32.mrb[0].mxu0
    %v447 = vadd.f32 %v355, %v446
    %v448 = vpop.f32.mrb[0].mxu0
    %v449 = vpop.f32.mrb[0].mxu0
    %v450 = vadd.f32 %v355, %v449
    %v451 = vpop.f32.mrb[0].mxu0
    %452 = vmatprep.mubr.bf16.mxu0 0
    %453 = vmatmul.mubr.bf16.gmra.mrb[0].mxu0 %v390
    %v454 = vpop.f32.mrb[0].mxu0
    %v455 = vadd.f32 %v355, %v454
    %v456 = vpop.f32.mrb[0].mxu0
    %v457 = vpop.f32.mrb[0].mxu0
    %v458 = vadd.f32 %v355, %v457
    %v459 = vpop.f32.mrb[0].mxu0
    %460 = vmatprep.mubr.bf16.mxu0 0
    %461 = vmatmul.mubr.bf16.gmra.mrb[0].mxu0 %v391
    %v462 = vpop.f32.mrb[0].mxu0
    %v463 = vadd.f32 %v355, %v462
    %v464 = vpop.f32.mrb[0].mxu0
    %v465 = vpop.f32.mrb[0].mxu0
    %v466 = vadd.f32 %v355, %v465
    %v467 = vpop.f32.mrb[0].mxu0
    %468 = vmatprep.mubr.bf16.mxu0 0
    %469 = vmatmul.mubr.bf16.gmra.mrb[0].mxu0 %v392
    %v470 = vpop.f32.mrb[0].mxu0
    %v471 = vadd.f32 %v355, %v470
    %v472 = vpop.f32.mrb[0].mxu0
    %v473 = vpop.f32.mrb[0].mxu0
    %v474 = vadd.f32 %v355, %v473
    %v475 = vpop.f32.mrb[0].mxu0
    %476 = vmatprep.mubr.bf16.mxu0 0
    %477 = vmatmul.mubr.bf16.gmra.mrb[0].mxu0 %v393
    %v478 = vpop.f32.mrb[0].mxu0
    %v479 = vadd.f32 %v355, %v478
    %v480 = vpop.f32.mrb[0].mxu0
    %v481 = vpop.f32.mrb[0].mxu0
    %v482 = vadd.f32 %v355, %v481
    %v483 = vpop.f32.mrb[0].mxu0
    %484 = vmatprep.mubr.bf16.mxu0 0
    %485 = vmatmul.mubr.bf16.gmra.mrb[0].mxu0 %v394
    %v486 = vpop.f32.mrb[0].mxu0
    %v487 = vadd.f32 %v355, %v486
    %v488 = vpop.f32.mrb[0].mxu0
    %v489 = vpop.f32.mrb[0].mxu0
    %v490 = vadd.f32 %v355, %v489
    %v491 = vpop.f32.mrb[0].mxu0
    %492 = vmatprep.mubr.bf16.mxu0 0
    %493 = vmatmul.mubr.bf16.gmra.mrb[0].mxu0 %v395
    %v494 = vpop.f32.mrb[0].mxu0
    %v495 = vadd.f32 %v355, %v494
    %v496 = vpop.f32.mrb[0].mxu0
    %v497 = vpop.f32.mrb[0].mxu0
    %v498 = vadd.f32 %v355, %v497
    %v499 = vpop.f32.mrb[0].mxu0
    %500 = vdwg.mxu0
    %v501 = vmax.f32 %v439, 0.0
    %v502 = vmax.f32 %v442, 0.0
    %v503 = vmax.f32 %v447, 0.0
    %v504 = vmax.f32 %v450, 0.0
    %v505 = vmax.f32 %v455, 0.0
    %v506 = vmax.f32 %v458, 0.0
    %v507 = vmax.f32 %v463, 0.0
    %v508 = vmax.f32 %v466, 0.0
    %v509 = vmax.f32 %v471, 0.0
    %v510 = vmax.f32 %v474, 0.0
    %v511 = vmax.f32 %v479, 0.0
    %v512 = vmax.f32 %v482, 0.0
    %v513 = vmax.f32 %v487, 0.0
    %v514 = vmax.f32 %v490, 0.0
    %v515 = vmax.f32 %v495, 0.0
    %v516 = vmax.f32 %v498, 0.0
    %v517 = vpack.c.bf16 %v502, %v501
    %v518 = vpack.c.bf16 %v504, %v503
    %v519 = vpack.c.bf16 %v506, %v505
    %v520 = vpack.c.bf16 %v508, %v507
    %v521 = vpack.c.bf16 %v510, %v509
    %v522 = vpack.c.bf16 %v512, %v511
    %v523 = vpack.c.bf16 %v514, %v513
    %v524 = vpack.c.bf16 %v516, %v515
    %v525 = vld [vmem:[#allocation8] sm:$0xf]
    %v526 = vld [vmem:[#allocation8 + $0x4] sm:$0xf]
    %v527 = vld [vmem:[#allocation8 + $0x8] sm:$0xf]
    %v528 = vld [vmem:[#allocation8 + $0xc] sm:$0xf]
    %v529 = vld [vmem:[#allocation8 + $0x10] sm:$0xf]
    %v530 = vld [vmem:[#allocation8 + $0x14] sm:$0xf]
    %v531 = vld [vmem:[#allocation8 + $0x18] sm:$0xf]
    %v532 = vld [vmem:[#allocation8 + $0x1c] sm:$0xf]
    %v533 = vld [vmem:[#allocation8 + $0x20] sm:$0xf]
    %v534 = vld [vmem:[#allocation8 + $0x24] sm:$0xf]
    %v535 = vld [vmem:[#allocation8 + $0x28] sm:$0xf]
    %v536 = vld [vmem:[#allocation8 + $0x2c] sm:$0xf]
    %v537 = vld [vmem:[#allocation8 + $0x30] sm:$0xf]
    %v538 = vld [vmem:[#allocation8 + $0x34] sm:$0xf]
    %v539 = vld [vmem:[#allocation8 + $0x38] sm:$0xf]
    %v540 = vld [vmem:[#allocation8 + $0x3c] sm:$0xf]
    %v557 = vunpack.c.l.b16 %v525
    %v558 = vunpack.c.l.b16 %v526
    %v559 = vunpack.c.l.b16 %v527
    %v560 = vunpack.c.l.b16 %v528
    %v561 = vunpack.c.l.b16 %v529
    %v562 = vunpack.c.l.b16 %v530
    %v563 = vunpack.c.l.b16 %v531
    %v564 = vunpack.c.l.b16 %v532
    %v565 = vunpack.c.l.b16 %v533
    %v566 = vunpack.c.l.b16 %v534
    %v567 = vunpack.c.l.b16 %v535
    %v568 = vunpack.c.l.b16 %v536
    %v569 = vunpack.c.l.b16 %v537
    %v570 = vunpack.c.l.b16 %v538
    %v571 = vunpack.c.l.b16 %v539
    %v572 = vunpack.c.l.b16 %v540
    %v573 = vpack.c.b16 %v558, %v557
    %v574 = vpack.c.b16 %v560, %v559
    %v575 = vpack.c.b16 %v562, %v561
    %v576 = vpack.c.b16 %v564, %v563
    %v577 = vpack.c.b16 %v566, %v565
    %v578 = vpack.c.b16 %v568, %v567
    %v579 = vpack.c.b16 %v570, %v569
    %v580 = vpack.c.b16 %v572, %v571
    %589 = vmatprep.subr.bf16.mxu0 0
    %590 = vmatpush1.bf16.msra.mxu0 %v573
    %591 = vmatprep.subr.bf16.mxu0 0
    %592 = vmatpush1.bf16.msra.mxu0 %v574
    %593 = vmatprep.subr.bf16.mxu0 0
    %594 = vmatpush1.bf16.msra.mxu0 %v575
    %595 = vmatprep.subr.bf16.mxu0 0
    %596 = vmatpush1.bf16.msra.mxu0 %v576
    %597 = vmatprep.subr.bf16.mxu0 0
    %598 = vmatpush1.bf16.msra.mxu0 %v577
    %599 = vmatprep.subr.bf16.mxu0 0
    %600 = vmatpush1.bf16.msra.mxu0 %v578
    %601 = vmatprep.subr.bf16.mxu0 0
    %602 = vmatpush1.bf16.msra.mxu0 %v579
    %603 = vmatprep.subr.bf16.mxu0 0
    %604 = vmatpush1.bf16.msra.mxu0 %v580
    %605 = vmatprep.subr.bf16.mxu0 0
    %606 = vmatpush1.bf16.msra.mxu0 0
    %607 = vmatprep.subr.bf16.mxu0 0
    %608 = vmatpush1.bf16.msra.mxu0 0
    %609 = vmatprep.subr.bf16.mxu0 0
    %610 = vmatpush1.bf16.msra.mxu0 0
    %611 = vmatprep.subr.bf16.mxu0 0
    %612 = vmatpush1.bf16.msra.mxu0 0
    %613 = vmatprep.subr.bf16.mxu0 0
    %614 = vmatpush1.bf16.msra.mxu0 0
    %615 = vmatprep.subr.bf16.mxu0 0
    %616 = vmatpush1.bf16.msra.mxu0 0
    %617 = vmatprep.subr.bf16.mxu0 0
    %618 = vmatpush1.bf16.msra.mxu0 0
    %619 = vmatprep.subr.bf16.mxu0 0
    %620 = vmatpush1.bf16.msra.mxu0 0
    %621 = vmatprep.mubr.bf16.mxu0 0
    %622 = vmatmul.mubr.bf16.gmra.mrb[0].mxu0 %v517
    %v623 = vpop.f32.mrb[0].mxu0
    %v624 = vadd.f32 0.0, %v623
    %v625 = vpop.f32.mrb[0].mxu0
    %v626 = vpop.f32.mrb[0].mxu0
    %v627 = vadd.f32 0.0, %v626
    %v628 = vpop.f32.mrb[0].mxu0
    %629 = vmatprep.mubr.bf16.mxu0 0
    %630 = vmatmul.mubr.bf16.gmra.mrb[0].mxu0 %v518
    %v631 = vpop.f32.mrb[0].mxu0
    %v632 = vadd.f32 0.0, %v631
    %v633 = vpop.f32.mrb[0].mxu0
    %v634 = vpop.f32.mrb[0].mxu0
    %v635 = vadd.f32 0.0, %v634
    %v636 = vpop.f32.mrb[0].mxu0
    %637 = vmatprep.mubr.bf16.mxu0 0
    %638 = vmatmul.mubr.bf16.gmra.mrb[0].mxu0 %v519
    %v639 = vpop.f32.mrb[0].mxu0
    %v640 = vadd.f32 0.0, %v639
    %v641 = vpop.f32.mrb[0].mxu0
    %v642 = vpop.f32.mrb[0].mxu0
    %v643 = vadd.f32 0.0, %v642
    %v644 = vpop.f32.mrb[0].mxu0
    %645 = vmatprep.mubr.bf16.mxu0 0
    %646 = vmatmul.mubr.bf16.gmra.mrb[0].mxu0 %v520
    %v647 = vpop.f32.mrb[0].mxu0
    %v648 = vadd.f32 0.0, %v647
    %v649 = vpop.f32.mrb[0].mxu0
    %v650 = vpop.f32.mrb[0].mxu0
    %v651 = vadd.f32 0.0, %v650
    %v652 = vpop.f32.mrb[0].mxu0
    %653 = vmatprep.mubr.bf16.mxu0 0
    %654 = vmatmul.mubr.bf16.gmra.mrb[0].mxu0 %v521
    %v655 = vpop.f32.mrb[0].mxu0
    %v656 = vadd.f32 0.0, %v655
    %v657 = vpop.f32.mrb[0].mxu0
    %v658 = vpop.f32.mrb[0].mxu0
    %v659 = vadd.f32 0.0, %v658
    %v660 = vpop.f32.mrb[0].mxu0
    %661 = vmatprep.mubr.bf16.mxu0 0
    %662 = vmatmul.mubr.bf16.gmra.mrb[0].mxu0 %v522
    %v663 = vpop.f32.mrb[0].mxu0
    %v664 = vadd.f32 0.0, %v663
    %v665 = vpop.f32.mrb[0].mxu0
    %v666 = vpop.f32.mrb[0].mxu0
    %v667 = vadd.f32 0.0, %v666
    %v668 = vpop.f32.mrb[0].mxu0
    %669 = vmatprep.mubr.bf16.mxu0 0
    %670 = vmatmul.mubr.bf16.gmra.mrb[0].mxu0 %v523
    %v671 = vpop.f32.mrb[0].mxu0
    %v672 = vadd.f32 0.0, %v671
    %v673 = vpop.f32.mrb[0].mxu0
    %v674 = vpop.f32.mrb[0].mxu0
    %v675 = vadd.f32 0.0, %v674
    %v676 = vpop.f32.mrb[0].mxu0
    %677 = vmatprep.mubr.bf16.mxu0 0
    %678 = vmatmul.mubr.bf16.gmra.mrb[0].mxu0 %v524
    %v679 = vpop.f32.mrb[0].mxu0
    %v680 = vadd.f32 0.0, %v679
    %v681 = vpop.f32.mrb[0].mxu0
    %v682 = vpop.f32.mrb[0].mxu0
    %v683 = vadd.f32 0.0, %v682
    %v684 = vpop.f32.mrb[0].mxu0
    %685 = vdwg.mxu0
    %v686 = vpack.c.bf16 %v627, %v624
    %v687 = vpack.c.bf16 %v635, %v632
    %v688 = vpack.c.bf16 %v643, %v640
    %v689 = vpack.c.bf16 %v651, %v648
    %v690 = vpack.c.bf16 %v659, %v656
    %v691 = vpack.c.bf16 %v667, %v664
    %v692 = vpack.c.bf16 %v675, %v672
    %v693 = vpack.c.bf16 %v683, %v680
    %v694 = vld [vmem:[%s4 + $0x1] sm:$0x1]
    %v695 = vlaneseq
    %v696 = vshrl.u32 %v695, 7
    %v697 = vsub.s32 0, %v696
    %v698 = vrot.slane %v694, %v697
    %699 = vmatprep.subr.bf16.mxu0 0
    %700 = vmatpush1.bf16.msra.mxu0 %v686
    %701 = vmatprep.subr.bf16.mxu0 0
    %702 = vmatpush1.bf16.msra.mxu0 %v687
    %703 = vmatprep.subr.bf16.mxu0 0
    %704 = vmatpush1.bf16.msra.mxu0 %v688
    %705 = vmatprep.subr.bf16.mxu0 0
    %706 = vmatpush1.bf16.msra.mxu0 %v689
    %707 = vmatprep.subr.bf16.mxu0 0
    %708 = vmatpush1.bf16.msra.mxu0 %v690
    %709 = vmatprep.subr.bf16.mxu0 0
    %710 = vmatpush1.bf16.msra.mxu0 %v691
    %711 = vmatprep.subr.bf16.mxu0 0
    %712 = vmatpush1.bf16.msra.mxu0 %v692
    %713 = vmatprep.subr.bf16.mxu0 0
    %714 = vmatpush1.bf16.msra.mxu0 %v693
    %715 = vmatprep.subr.bf16.mxu0 0
    %716 = vmatpush1.bf16.msra.mxu0 0
    %717 = vmatprep.subr.bf16.mxu0 0
    %718 = vmatpush1.bf16.msra.mxu0 0
    %719 = vmatprep.subr.bf16.mxu0 0
    %720 = vmatpush1.bf16.msra.mxu0 0
    %721 = vmatprep.subr.bf16.mxu0 0
    %722 = vmatpush1.bf16.msra.mxu0 0
    %723 = vmatprep.subr.bf16.mxu0 0
    %724 = vmatpush1.bf16.msra.mxu0 0
    %725 = vmatprep.subr.bf16.mxu0 0
    %726 = vmatpush1.bf16.msra.mxu0 0
    %727 = vmatprep.subr.bf16.mxu0 0
    %728 = vmatpush1.bf16.msra.mxu0 0
    %729 = vmatprep.subr.bf16.mxu0 0
    %730 = vmatpush1.bf16.msra.mxu0 0
    %731 = vmatprep.mubr.bf16.mxu0 0
    %732 = vmatmul.mubr.bf16.gmra.mrb[0].mxu0 %v388
    %v733 = vpop.f32.mrb[0].mxu0
    %v734 = vadd.f32 %v698, %v733
    %v735 = vpop.f32.mrb[0].mxu0
    %v736 = vpop.f32.mrb[0].mxu0
    %v737 = vadd.f32 %v698, %v736
    %v738 = vpop.f32.mrb[0].mxu0
    %739 = vmatprep.mubr.bf16.mxu0 0
    %740 = vmatmul.mubr.bf16.gmra.mrb[0].mxu0 %v389
    %v741 = vpop.f32.mrb[0].mxu0
    %v742 = vadd.f32 %v698, %v741
    %v743 = vpop.f32.mrb[0].mxu0
    %v744 = vpop.f32.mrb[0].mxu0
    %v745 = vadd.f32 %v698, %v744
    %v746 = vpop.f32.mrb[0].mxu0
    %747 = vmatprep.mubr.bf16.mxu0 0
    %748 = vmatmul.mubr.bf16.gmra.mrb[0].mxu0 %v390
    %v749 = vpop.f32.mrb[0].mxu0
    %v750 = vadd.f32 %v698, %v749
    %v751 = vpop.f32.mrb[0].mxu0
    %v752 = vpop.f32.mrb[0].mxu0
    %v753 = vadd.f32 %v698, %v752
    %v754 = vpop.f32.mrb[0].mxu0
    %755 = vmatprep.mubr.bf16.mxu0 0
    %756 = vmatmul.mubr.bf16.gmra.mrb[0].mxu0 %v391
    %v757 = vpop.f32.mrb[0].mxu0
    %v758 = vadd.f32 %v698, %v757
    %v759 = vpop.f32.mrb[0].mxu0
    %v760 = vpop.f32.mrb[0].mxu0
    %v761 = vadd.f32 %v698, %v760
    %v762 = vpop.f32.mrb[0].mxu0
    %763 = vmatprep.mubr.bf16.mxu0 0
    %764 = vmatmul.mubr.bf16.gmra.mrb[0].mxu0 %v392
    %v765 = vpop.f32.mrb[0].mxu0
    %v766 = vadd.f32 %v698, %v765
    %v767 = vpop.f32.mrb[0].mxu0
    %v768 = vpop.f32.mrb[0].mxu0
    %v769 = vadd.f32 %v698, %v768
    %v770 = vpop.f32.mrb[0].mxu0
    %771 = vmatprep.mubr.bf16.mxu0 0
    %772 = vmatmul.mubr.bf16.gmra.mrb[0].mxu0 %v393
    %v773 = vpop.f32.mrb[0].mxu0
    %v774 = vadd.f32 %v698, %v773
    %v775 = vpop.f32.mrb[0].mxu0
    %v776 = vpop.f32.mrb[0].mxu0
    %v777 = vadd.f32 %v698, %v776
    %v778 = vpop.f32.mrb[0].mxu0
    %779 = vmatprep.mubr.bf16.mxu0 0
    %780 = vmatmul.mubr.bf16.gmra.mrb[0].mxu0 %v394
    %v781 = vpop.f32.mrb[0].mxu0
    %v782 = vadd.f32 %v698, %v781
    %v783 = vpop.f32.mrb[0].mxu0
    %v784 = vpop.f32.mrb[0].mxu0
    %v785 = vadd.f32 %v698, %v784
    %v786 = vpop.f32.mrb[0].mxu0
    %787 = vmatprep.mubr.bf16.mxu0 0
    %788 = vmatmul.mubr.bf16.gmra.mrb[0].mxu0 %v395
    %v789 = vpop.f32.mrb[0].mxu0
    %v790 = vadd.f32 %v698, %v789
    %v791 = vpop.f32.mrb[0].mxu0
    %v792 = vpop.f32.mrb[0].mxu0
    %v793 = vadd.f32 %v698, %v792
    %v794 = vpop.f32.mrb[0].mxu0
    %795 = vdwg.mxu0
    %v796 = vmax.f32 %v734, 0.0
    %v797 = vmax.f32 %v737, 0.0
    %v798 = vmax.f32 %v742, 0.0
    %v799 = vmax.f32 %v745, 0.0
    %v800 = vmax.f32 %v750, 0.0
    %v801 = vmax.f32 %v753, 0.0
    %v802 = vmax.f32 %v758, 0.0
    %v803 = vmax.f32 %v761, 0.0
    %v804 = vmax.f32 %v766, 0.0
    %v805 = vmax.f32 %v769, 0.0
    %v806 = vmax.f32 %v774, 0.0
    %v807 = vmax.f32 %v777, 0.0
    %v808 = vmax.f32 %v782, 0.0
    %v809 = vmax.f32 %v785, 0.0
    %v810 = vmax.f32 %v790, 0.0
    %v811 = vmax.f32 %v793, 0.0
    %v812 = vpack.c.bf16 %v797, %v796
    %v813 = vpack.c.bf16 %v799, %v798
    %v814 = vpack.c.bf16 %v801, %v800
    %v815 = vpack.c.bf16 %v803, %v802
    %v816 = vpack.c.bf16 %v805, %v804
    %v817 = vpack.c.bf16 %v807, %v806
    %v818 = vpack.c.bf16 %v809, %v808
    %v819 = vpack.c.bf16 %v811, %v810
    %s820 = scalar_lea.vmem [#allocation8], 64
    %v821 = vld [vmem:[%s820] sm:$0xf]
    %v822 = vld [vmem:[%s820 + $0x4] sm:$0xf]
    %v823 = vld [vmem:[%s820 + $0x8] sm:$0xf]
    %v824 = vld [vmem:[%s820 + $0xc] sm:$0xf]
    %v825 = vld [vmem:[%s820 + $0x10] sm:$0xf]
    %v826 = vld [vmem:[%s820 + $0x14] sm:$0xf]
    %v827 = vld [vmem:[%s820 + $0x18] sm:$0xf]
    %v828 = vld [vmem:[%s820 + $0x1c] sm:$0xf]
    %v829 = vld [vmem:[%s820 + $0x20] sm:$0xf]
    %v830 = vld [vmem:[%s820 + $0x24] sm:$0xf]
    %v831 = vld [vmem:[%s820 + $0x28] sm:$0xf]
    %v832 = vld [vmem:[%s820 + $0x2c] sm:$0xf]
    %v833 = vld [vmem:[%s820 + $0x30] sm:$0xf]
    %v834 = vld [vmem:[%s820 + $0x34] sm:$0xf]
    %v835 = vld [vmem:[%s820 + $0x38] sm:$0xf]
    %v836 = vld [vmem:[%s820 + $0x3c] sm:$0xf]
    %v853 = vunpack.c.l.b16 %v821
    %v854 = vunpack.c.l.b16 %v822
    %v855 = vunpack.c.l.b16 %v823
    %v856 = vunpack.c.l.b16 %v824
    %v857 = vunpack.c.l.b16 %v825
    %v858 = vunpack.c.l.b16 %v826
    %v859 = vunpack.c.l.b16 %v827
    %v860 = vunpack.c.l.b16 %v828
    %v861 = vunpack.c.l.b16 %v829
    %v862 = vunpack.c.l.b16 %v830
    %v863 = vunpack.c.l.b16 %v831
    %v864 = vunpack.c.l.b16 %v832
    %v865 = vunpack.c.l.b16 %v833
    %v866 = vunpack.c.l.b16 %v834
    %v867 = vunpack.c.l.b16 %v835
    %v868 = vunpack.c.l.b16 %v836
    %v869 = vpack.c.b16 %v854, %v853
    %v870 = vpack.c.b16 %v856, %v855
    %v871 = vpack.c.b16 %v858, %v857
    %v872 = vpack.c.b16 %v860, %v859
    %v873 = vpack.c.b16 %v862, %v861
    %v874 = vpack.c.b16 %v864, %v863
    %v875 = vpack.c.b16 %v866, %v865
    %v876 = vpack.c.b16 %v868, %v867
    %885 = vmatprep.subr.bf16.mxu0 0
    %886 = vmatpush1.bf16.msra.mxu0 %v869
    %887 = vmatprep.subr.bf16.mxu0 0
    %888 = vmatpush1.bf16.msra.mxu0 %v870
    %889 = vmatprep.subr.bf16.mxu0 0
    %890 = vmatpush1.bf16.msra.mxu0 %v871
    %891 = vmatprep.subr.bf16.mxu0 0
    %892 = vmatpush1.bf16.msra.mxu0 %v872
    %893 = vmatprep.subr.bf16.mxu0 0
    %894 = vmatpush1.bf16.msra.mxu0 %v873
    %895 = vmatprep.subr.bf16.mxu0 0
    %896 = vmatpush1.bf16.msra.mxu0 %v874
    %897 = vmatprep.subr.bf16.mxu0 0
    %898 = vmatpush1.bf16.msra.mxu0 %v875
    %899 = vmatprep.subr.bf16.mxu0 0
    %900 = vmatpush1.bf16.msra.mxu0 %v876
    %901 = vmatprep.subr.bf16.mxu0 0
    %902 = vmatpush1.bf16.msra.mxu0 0
    %903 = vmatprep.subr.bf16.mxu0 0
    %904 = vmatpush1.bf16.msra.mxu0 0
    %905 = vmatprep.subr.bf16.mxu0 0
    %906 = vmatpush1.bf16.msra.mxu0 0
    %907 = vmatprep.subr.bf16.mxu0 0
    %908 = vmatpush1.bf16.msra.mxu0 0
    %909 = vmatprep.subr.bf16.mxu0 0
    %910 = vmatpush1.bf16.msra.mxu0 0
    %911 = vmatprep.subr.bf16.mxu0 0
    %912 = vmatpush1.bf16.msra.mxu0 0
    %913 = vmatprep.subr.bf16.mxu0 0
    %914 = vmatpush1.bf16.msra.mxu0 0
    %915 = vmatprep.subr.bf16.mxu0 0
    %916 = vmatpush1.bf16.msra.mxu0 0
    %917 = vmatprep.mubr.bf16.mxu0 0
    %918 = vmatmul.mubr.bf16.gmra.mrb[0].mxu0 %v812
    %v919 = vpop.f32.mrb[0].mxu0
    %v920 = vadd.f32 0.0, %v919
    %v921 = vpop.f32.mrb[0].mxu0
    %v922 = vpop.f32.mrb[0].mxu0
    %v923 = vadd.f32 0.0, %v922
    %v924 = vpop.f32.mrb[0].mxu0
    %925 = vmatprep.mubr.bf16.mxu0 0
    %926 = vmatmul.mubr.bf16.gmra.mrb[0].mxu0 %v813
    %v927 = vpop.f32.mrb[0].mxu0
    %v928 = vadd.f32 0.0, %v927
    %v929 = vpop.f32.mrb[0].mxu0
    %v930 = vpop.f32.mrb[0].mxu0
    %v931 = vadd.f32 0.0, %v930
    %v932 = vpop.f32.mrb[0].mxu0
    %933 = vmatprep.mubr.bf16.mxu0 0
    %934 = vmatmul.mubr.bf16.gmra.mrb[0].mxu0 %v814
    %v935 = vpop.f32.mrb[0].mxu0
    %v936 = vadd.f32 0.0, %v935
    %v937 = vpop.f32.mrb[0].mxu0
    %v938 = vpop.f32.mrb[0].mxu0
    %v939 = vadd.f32 0.0, %v938
    %v940 = vpop.f32.mrb[0].mxu0
    %941 = vmatprep.mubr.bf16.mxu0 0
    %942 = vmatmul.mubr.bf16.gmra.mrb[0].mxu0 %v815
    %v943 = vpop.f32.mrb[0].mxu0
    %v944 = vadd.f32 0.0, %v943
    %v945 = vpop.f32.mrb[0].mxu0
    %v946 = vpop.f32.mrb[0].mxu0
    %v947 = vadd.f32 0.0, %v946
    %v948 = vpop.f32.mrb[0].mxu0
    %949 = vmatprep.mubr.bf16.mxu0 0
    %950 = vmatmul.mubr.bf16.gmra.mrb[0].mxu0 %v816
    %v951 = vpop.f32.mrb[0].mxu0
    %v952 = vadd.f32 0.0, %v951
    %v953 = vpop.f32.mrb[0].mxu0
    %v954 = vpop.f32.mrb[0].mxu0
    %v955 = vadd.f32 0.0, %v954
    %v956 = vpop.f32.mrb[0].mxu0
    %957 = vmatprep.mubr.bf16.mxu0 0
    %958 = vmatmul.mubr.bf16.gmra.mrb[0].mxu0 %v817
    %v959 = vpop.f32.mrb[0].mxu0
    %v960 = vadd.f32 0.0, %v959
    %v961 = vpop.f32.mrb[0].mxu0
    %v962 = vpop.f32.mrb[0].mxu0
    %v963 = vadd.f32 0.0, %v962
    %v964 = vpop.f32.mrb[0].mxu0
    %965 = vmatprep.mubr.bf16.mxu0 0
    %966 = vmatmul.mubr.bf16.gmra.mrb[0].mxu0 %v818
    %v967 = vpop.f32.mrb[0].mxu0
    %v968 = vadd.f32 0.0, %v967
    %v969 = vpop.f32.mrb[0].mxu0
    %v970 = vpop.f32.mrb[0].mxu0
    %v971 = vadd.f32 0.0, %v970
    %v972 = vpop.f32.mrb[0].mxu0
    %973 = vmatprep.mubr.bf16.mxu0 0
    %974 = vmatmul.mubr.bf16.gmra.mrb[0].mxu0 %v819
    %v975 = vpop.f32.mrb[0].mxu0
    %v976 = vadd.f32 0.0, %v975
    %v977 = vpop.f32.mrb[0].mxu0
    %v978 = vpop.f32.mrb[0].mxu0
    %v979 = vadd.f32 0.0, %v978
    %v980 = vpop.f32.mrb[0].mxu0
    %981 = vdwg.mxu0
    %v982 = vpack.c.bf16 %v923, %v920
    %v983 = vpack.c.bf16 %v931, %v928
    %v984 = vpack.c.bf16 %v939, %v936
    %v985 = vpack.c.bf16 %v947, %v944
    %v986 = vpack.c.bf16 %v955, %v952
    %v987 = vpack.c.bf16 %v963, %v960
    %v988 = vpack.c.bf16 %v971, %v968
    %v989 = vpack.c.bf16 %v979, %v976
    %v990 = vld [vmem:[%s4 + $0x2] sm:$0x1]
    %v991 = vlaneseq
    %v992 = vshrl.u32 %v991, 7
    %v993 = vsub.s32 0, %v992
    %v994 = vrot.slane %v990, %v993
    %995 = vmatprep.subr.bf16.mxu0 0
    %996 = vmatpush1.bf16.msra.mxu0 %v982
    %997 = vmatprep.subr.bf16.mxu0 0
    %998 = vmatpush1.bf16.msra.mxu0 %v983
    %999 = vmatprep.subr.bf16.mxu0 0
    %1000 = vmatpush1.bf16.msra.mxu0 %v984
    %1001 = vmatprep.subr.bf16.mxu0 0
    %1002 = vmatpush1.bf16.msra.mxu0 %v985
    %1003 = vmatprep.subr.bf16.mxu0 0
    %1004 = vmatpush1.bf16.msra.mxu0 %v986
    %1005 = vmatprep.subr.bf16.mxu0 0
    %1006 = vmatpush1.bf16.msra.mxu0 %v987
    %1007 = vmatprep.subr.bf16.mxu0 0
    %1008 = vmatpush1.bf16.msra.mxu0 %v988
    %1009 = vmatprep.subr.bf16.mxu0 0
    %1010 = vmatpush1.bf16.msra.mxu0 %v989
    %1011 = vmatprep.subr.bf16.mxu0 0
    %1012 = vmatpush1.bf16.msra.mxu0 0
    %1013 = vmatprep.subr.bf16.mxu0 0
    %1014 = vmatpush1.bf16.msra.mxu0 0
    %1015 = vmatprep.subr.bf16.mxu0 0
    %1016 = vmatpush1.bf16.msra.mxu0 0
    %1017 = vmatprep.subr.bf16.mxu0 0
    %1018 = vmatpush1.bf16.msra.mxu0 0
    %1019 = vmatprep.subr.bf16.mxu0 0
    %1020 = vmatpush1.bf16.msra.mxu0 0
    %1021 = vmatprep.subr.bf16.mxu0 0
    %1022 = vmatpush1.bf16.msra.mxu0 0
    %1023 = vmatprep.subr.bf16.mxu0 0
    %1024 = vmatpush1.bf16.msra.mxu0 0
    %1025 = vmatprep.subr.bf16.mxu0 0
    %1026 = vmatpush1.bf16.msra.mxu0 0
    %1027 = vmatprep.mubr.bf16.mxu0 0
    %1028 = vmatmul.mubr.bf16.gmra.mrb[0].mxu0 %v388
    %v1029 = vpop.f32.mrb[0].mxu0
    %v1030 = vadd.f32 %v994, %v1029
    %v1031 = vpop.f32.mrb[0].mxu0
    %v1032 = vpop.f32.mrb[0].mxu0
    %v1033 = vadd.f32 %v994, %v1032
    %v1034 = vpop.f32.mrb[0].mxu0
    %1035 = vmatprep.mubr.bf16.mxu0 0
    %1036 = vmatmul.mubr.bf16.gmra.mrb[0].mxu0 %v389
    %v1037 = vpop.f32.mrb[0].mxu0
    %v1038 = vadd.f32 %v994, %v1037
    %v1039 = vpop.f32.mrb[0].mxu0
    %v1040 = vpop.f32.mrb[0].mxu0
    %v1041 = vadd.f32 %v994, %v1040
    %v1042 = vpop.f32.mrb[0].mxu0
    %1043 = vmatprep.mubr.bf16.mxu0 0
    %1044 = vmatmul.mubr.bf16.gmra.mrb[0].mxu0 %v390
    %v1045 = vpop.f32.mrb[0].mxu0
    %v1046 = vadd.f32 %v994, %v1045
    %v1047 = vpop.f32.mrb[0].mxu0
    %v1048 = vpop.f32.mrb[0].mxu0
    %v1049 = vadd.f32 %v994, %v1048
    %v1050 = vpop.f32.mrb[0].mxu0
    %1051 = vmatprep.mubr.bf16.mxu0 0
    %1052 = vmatmul.mubr.bf16.gmra.mrb[0].mxu0 %v391
    %v1053 = vpop.f32.mrb[0].mxu0
    %v1054 = vadd.f32 %v994, %v1053
    %v1055 = vpop.f32.mrb[0].mxu0
    %v1056 = vpop.f32.mrb[0].mxu0
    %v1057 = vadd.f32 %v994, %v1056
    %v1058 = vpop.f32.mrb[0].mxu0
    %1059 = vmatprep.mubr.bf16.mxu0 0
    %1060 = vmatmul.mubr.bf16.gmra.mrb[0].mxu0 %v392
    %v1061 = vpop.f32.mrb[0].mxu0
    %v1062 = vadd.f32 %v994, %v1061
    %v1063 = vpop.f32.mrb[0].mxu0
    %v1064 = vpop.f32.mrb[0].mxu0
    %v1065 = vadd.f32 %v994, %v1064
    %v1066 = vpop.f32.mrb[0].mxu0
    %1067 = vmatprep.mubr.bf16.mxu0 0
    %1068 = vmatmul.mubr.bf16.gmra.mrb[0].mxu0 %v393
    %v1069 = vpop.f32.mrb[0].mxu0
    %v1070 = vadd.f32 %v994, %v1069
    %v1071 = vpop.f32.mrb[0].mxu0
    %v1072 = vpop.f32.mrb[0].mxu0
    %v1073 = vadd.f32 %v994, %v1072
    %v1074 = vpop.f32.mrb[0].mxu0
    %1075 = vmatprep.mubr.bf16.mxu0 0
    %1076 = vmatmul.mubr.bf16.gmra.mrb[0].mxu0 %v394
    %v1077 = vpop.f32.mrb[0].mxu0
    %v1078 = vadd.f32 %v994, %v1077
    %v1079 = vpop.f32.mrb[0].mxu0
    %v1080 = vpop.f32.mrb[0].mxu0
    %v1081 = vadd.f32 %v994, %v1080
    %v1082 = vpop.f32.mrb[0].mxu0
    %1083 = vmatprep.mubr.bf16.mxu0 0
    %1084 = vmatmul.mubr.bf16.gmra.mrb[0].mxu0 %v395
    %v1085 = vpop.f32.mrb[0].mxu0
    %v1086 = vadd.f32 %v994, %v1085
    %v1087 = vpop.f32.mrb[0].mxu0
    %v1088 = vpop.f32.mrb[0].mxu0
    %v1089 = vadd.f32 %v994, %v1088
    %v1090 = vpop.f32.mrb[0].mxu0
    %1091 = vdwg.mxu0
    %v1092 = vmax.f32 %v1030, 0.0
    %v1093 = vmax.f32 %v1033, 0.0
    %v1094 = vmax.f32 %v1038, 0.0
    %v1095 = vmax.f32 %v1041, 0.0
    %v1096 = vmax.f32 %v1046, 0.0
    %v1097 = vmax.f32 %v1049, 0.0
    %v1098 = vmax.f32 %v1054, 0.0
    %v1099 = vmax.f32 %v1057, 0.0
    %v1100 = vmax.f32 %v1062, 0.0
    %v1101 = vmax.f32 %v1065, 0.0
    %v1102 = vmax.f32 %v1070, 0.0
    %v1103 = vmax.f32 %v1073, 0.0
    %v1104 = vmax.f32 %v1078, 0.0
    %v1105 = vmax.f32 %v1081, 0.0
    %v1106 = vmax.f32 %v1086, 0.0
    %v1107 = vmax.f32 %v1089, 0.0
    %v1108 = vpack.c.bf16 %v1093, %v1092
    %v1109 = vpack.c.bf16 %v1095, %v1094
    %v1110 = vpack.c.bf16 %v1097, %v1096
    %v1111 = vpack.c.bf16 %v1099, %v1098
    %v1112 = vpack.c.bf16 %v1101, %v1100
    %v1113 = vpack.c.bf16 %v1103, %v1102
    %v1114 = vpack.c.bf16 %v1105, %v1104
    %v1115 = vpack.c.bf16 %v1107, %v1106
    %v1116 = vld [vmem:[%s5] sm:$0xf]
    %1117 = vmatprep.subr.bf16.mxu0 0
    %1118 = vmatpush1.bf16.msra.mxu0 %v1108
    %1119 = vmatprep.subr.bf16.mxu0 0
    %1120 = vmatpush1.bf16.msra.mxu0 %v1109
    %1121 = vmatprep.subr.bf16.mxu0 0
    %1122 = vmatpush1.bf16.msra.mxu0 %v1110
    %1123 = vmatprep.subr.bf16.mxu0 0
    %1124 = vmatpush1.bf16.msra.mxu0 %v1111
    %1125 = vmatprep.subr.bf16.mxu0 0
    %1126 = vmatpush1.bf16.msra.mxu0 %v1112
    %1127 = vmatprep.subr.bf16.mxu0 0
    %1128 = vmatpush1.bf16.msra.mxu0 %v1113
    %1129 = vmatprep.subr.bf16.mxu0 0
    %1130 = vmatpush1.bf16.msra.mxu0 %v1114
    %1131 = vmatprep.subr.bf16.mxu0 0
    %1132 = vmatpush1.bf16.msra.mxu0 %v1115
    %1133 = vmatprep.subr.bf16.mxu0 0
    %1134 = vmatpush1.bf16.msra.mxu0 0
    %1135 = vmatprep.subr.bf16.mxu0 0
    %1136 = vmatpush1.bf16.msra.mxu0 0
    %1137 = vmatprep.subr.bf16.mxu0 0
    %1138 = vmatpush1.bf16.msra.mxu0 0
    %1139 = vmatprep.subr.bf16.mxu0 0
    %1140 = vmatpush1.bf16.msra.mxu0 0
    %1141 = vmatprep.subr.bf16.mxu0 0
    %1142 = vmatpush1.bf16.msra.mxu0 0
    %1143 = vmatprep.subr.bf16.mxu0 0
    %1144 = vmatpush1.bf16.msra.mxu0 0
    %1145 = vmatprep.subr.bf16.mxu0 0
    %1146 = vmatpush1.bf16.msra.mxu0 0
    %1147 = vmatprep.subr.bf16.mxu0 0
    %1148 = vmatpush1.bf16.msra.mxu0 0
    %1149 = vmatprep.mubr.bf16.mxu0 0
    %1150 = vmatmul.mubr.bf16.gmra.mrb[0].mxu0 %v1116
    %v1151 = vpop.f32.mrb[0].mxu0
    %v1152 = vadd.f32 0.0, %v1151
    %v1153 = vpop.f32.mrb[0].mxu0
    %v1154 = vpop.f32.mrb[0].mxu0
    %v1155 = vpop.f32.mrb[0].mxu0
    %1156 = vdwg.mxu0
    %v1157 = vld [vmem:[%s6] sm:$0xff]
    %v1158 = vmul.f32 %v1152, %v1157
    %v1159 = vpack.c.bf16 %v1158, %v1158
    %v1160 = vld [vmem:[#allocation10] sm:$0xf]
    %v1161 = vld [vmem:[#allocation10 + $0x4] sm:$0xf]
    %v1162 = vld [vmem:[#allocation10 + $0x8] sm:$0xf]
    %v1163 = vld [vmem:[#allocation10 + $0xc] sm:$0xf]
    %v1164 = vld [vmem:[#allocation10 + $0x10] sm:$0xf]
    %v1165 = vld [vmem:[#allocation10 + $0x14] sm:$0xf]
    %v1166 = vld [vmem:[#allocation10 + $0x18] sm:$0xf]
    %v1167 = vld [vmem:[#allocation10 + $0x1c] sm:$0xf]
    %v1168 = vld [vmem:[#allocation10 + $0x20] sm:$0xf]
    %v1169 = vld [vmem:[#allocation10 + $0x24] sm:$0xf]
    %v1170 = vld [vmem:[#allocation10 + $0x28] sm:$0xf]
    %v1171 = vld [vmem:[#allocation10 + $0x2c] sm:$0xf]
    %v1172 = vld [vmem:[#allocation10 + $0x30] sm:$0xf]
    %v1173 = vld [vmem:[#allocation10 + $0x34] sm:$0xf]
    %v1174 = vld [vmem:[#allocation10 + $0x38] sm:$0xf]
    %v1175 = vld [vmem:[#allocation10 + $0x3c] sm:$0xf]
    %v1176 = vld [vmem:[%s8] sm:$0x1]
    %v1178 = vlaneseq
    %v1179 = vshrl.u32 %v1178, 7
    %v1180 = vsub.s32 0, %v1179
    %v1181 = vrot.slane %v1176, %v1180
    %v1199 = vunpack.c.l.b16 %v1160
    %v1200 = vunpack.c.l.b16 %v1161
    %v1201 = vunpack.c.l.b16 %v1162
    %v1202 = vunpack.c.l.b16 %v1163
    %v1203 = vunpack.c.l.b16 %v1164
    %v1204 = vunpack.c.l.b16 %v1165
    %v1205 = vunpack.c.l.b16 %v1166
    %v1206 = vunpack.c.l.b16 %v1167
    %v1207 = vunpack.c.l.b16 %v1168
    %v1208 = vunpack.c.l.b16 %v1169
    %v1209 = vunpack.c.l.b16 %v1170
    %v1210 = vunpack.c.l.b16 %v1171
    %v1211 = vunpack.c.l.b16 %v1172
    %v1212 = vunpack.c.l.b16 %v1173
    %v1213 = vunpack.c.l.b16 %v1174
    %v1214 = vunpack.c.l.b16 %v1175
    %v1215 = vpack.c.b16 %v1200, %v1199
    %v1216 = vpack.c.b16 %v1202, %v1201
    %v1217 = vpack.c.b16 %v1204, %v1203
    %v1218 = vpack.c.b16 %v1206, %v1205
    %v1219 = vpack.c.b16 %v1208, %v1207
    %v1220 = vpack.c.b16 %v1210, %v1209
    %v1221 = vpack.c.b16 %v1212, %v1211
    %v1222 = vpack.c.b16 %v1214, %v1213
    %1231 = vmatprep.subr.bf16.mxu0 0
    %1232 = vmatpush1.bf16.msra.mxu0 %v1215
    %1233 = vmatprep.subr.bf16.mxu0 0
    %1234 = vmatpush1.bf16.msra.mxu0 %v1216
    %1235 = vmatprep.subr.bf16.mxu0 0
    %1236 = vmatpush1.bf16.msra.mxu0 %v1217
    %1237 = vmatprep.subr.bf16.mxu0 0
    %1238 = vmatpush1.bf16.msra.mxu0 %v1218
    %1239 = vmatprep.subr.bf16.mxu0 0
    %1240 = vmatpush1.bf16.msra.mxu0 %v1219
    %1241 = vmatprep.subr.bf16.mxu0 0
    %1242 = vmatpush1.bf16.msra.mxu0 %v1220
    %1243 = vmatprep.subr.bf16.mxu0 0
    %1244 = vmatpush1.bf16.msra.mxu0 %v1221
    %1245 = vmatprep.subr.bf16.mxu0 0
    %1246 = vmatpush1.bf16.msra.mxu0 %v1222
    %1247 = vmatprep.subr.bf16.mxu0 0
    %1248 = vmatpush1.bf16.msra.mxu0 0
    %1249 = vmatprep.subr.bf16.mxu0 0
    %1250 = vmatpush1.bf16.msra.mxu0 0
    %1251 = vmatprep.subr.bf16.mxu0 0
    %1252 = vmatpush1.bf16.msra.mxu0 0
    %1253 = vmatprep.subr.bf16.mxu0 0
    %1254 = vmatpush1.bf16.msra.mxu0 0
    %1255 = vmatprep.subr.bf16.mxu0 0
    %1256 = vmatpush1.bf16.msra.mxu0 0
    %1257 = vmatprep.subr.bf16.mxu0 0
    %1258 = vmatpush1.bf16.msra.mxu0 0
    %1259 = vmatprep.subr.bf16.mxu0 0
    %1260 = vmatpush1.bf16.msra.mxu0 0
    %1261 = vmatprep.subr.bf16.mxu0 0
    %1262 = vmatpush1.bf16.msra.mxu0 0
    %1263 = vmatprep.mubr.bf16.mxu0 0
    %1264 = vmatmul.mubr.bf16.gmra.mrb[0].mxu0 %v1159
    %v1265 = vpop.f32.mrb[0].mxu0
    %v1266 = vadd.f32 %v1181, %v1265
    %v1267 = vpop.f32.mrb[0].mxu0
    %v1268 = vpop.f32.mrb[0].mxu0
    %v1269 = vpop.f32.mrb[0].mxu0
    %1270 = vdwg.mxu0
    %1271 = vmax.xlane.f32.xlu0 %v1266
    %v1272 = vpop.xlane.xlu0 %1271
    %v1273 = vsub.f32 %v1266, %v1272
    %v1274 = vmul.f32 %v1273, 1.442695
    %v1275 = vpow.pop %v1274
    %1276 = vadd.xlane.f32.xlu0 %v1275
    %v1277 = vpop.xlane.xlu0 %1276
    %v1278 = vlog2.pop %v1277
    %v1279 = vmul.f32 %v1278, 0.6931472
    %v1280 = vadd.f32 %v1279, %v1272
    %v1281 = vsub.f32 %v1266, %v1280
    %1282 = vst [vmem:[#allocation11] sm:$0xff] %v1281
    // Predicated region
    $region58: #{tpu_custom_call.1} parent=1 // pred_check
      _
    $region59: #{tpu_custom_call.1} parent=1 // pred_check_branch
      %1284 = sbr.rel (0) target = $region61
    $region60: #{tpu_custom_call.1} parent=1 // pred_region
      %s1286 = ssub.s32 128, 128
      %1287 = vsyncadd [#allocation4], %s1286
      %s1289 = sshll.u32 [#allocation11], 4
      %s1290 = int_to_ptr.vmem [resolvable:$true] %s1289
      %1292 = dma.vmem_to_hbm [thread:$0]  %s1290, 128, %s9, [#allocation4]
    $region61: #{tpu_custom_call.1} parent=1 // pred_fallthru
      _
    // Predicated region
    $region62: #{tpu_custom_call.1} parent=1 // pred_check
      _
    $region63: #{tpu_custom_call.1} parent=1 // pred_check_branch
      %1294 = sbr.rel (0) target = $region65
    $region64: #{tpu_custom_call.1} parent=1 // pred_region
      %1295 = dma.done [#allocation4], 128
    $region65: #{tpu_custom_call.1} parent=1 // pred_fallthru
      _
    %1296 = vsyncpa [#allocation3], 1
    %1297 = vsyncpa [#allocation6], 1
    %1298 = vsyncpa [#allocation9], 1
    %1299 = vsyncpa [#allocation4], 1

</llo_original>
